<compile_context>
chip_gen: v7x
topology: tpu7x:2x2x1
jax: 0.10.0
libtpu: 0.0.40
codegen_flags: <defaults>
</compile_context>

<pallas_src>
import jax
import jax.numpy as jnp
from jax.experimental import pallas as pl
from jax.experimental.pallas import tpu as pltpu

STATNUM = 32     # synthetic len(e.getstat())
HIDDEN = 30      # logical hidden width (as in the PyTorch module)
HPAD = 32        # sublane-aligned hidden width used by the kernel
N_RES = 6


def modelv_kernel(x_ref, w1_ref, b1_ref, wh_ref, bh_ref, w2_ref, b2_ref, o_ref):
    cdt = w1_ref.dtype                       # compute dtype of the matmul inputs
    x = x_ref[...].astype(cdt)               # (TILE_B, STATNUM)

    # f1 + relu (MXU, f32 accumulation)
    h = jnp.dot(x, w1_ref[...], preferred_element_type=jnp.float32)
    h = jnp.maximum(h + b1_ref[...], 0.0)    # (TILE_B, HPAD) f32

    # 6 residual blocks: h = h + relu(h @ Wi + bi)   (static unroll)
    for i in range(N_RES):
        z = jnp.dot(h.astype(cdt), wh_ref[i], preferred_element_type=jnp.float32)
        z = jnp.maximum(z + bh_ref[i], 0.0)
        h = h + z

    # Head: instead of a (HPAD, 1) MXU matmul + width-1 (masked) store, do a
    # VPU multiply + XLU lane reduce and store lane-dense (batch on lanes).
    w2 = w2_ref[...].astype(jnp.float32)                 # (1, HPAD)
    y = jnp.sum(h * w2, axis=-1)[None, :]                # (1, TILE_B)
    o_ref[...] = y + b2_ref[...]                         # broadcast (1, 1) bias


def modelv_forward(x, kparams, *, tile_b=1024):
    """x: (B, STATNUM) float32. kparams: padded params from pad_params()."""
    w1, b1, wh, bh, w2, b2 = kparams
    cdt = w1.dtype
    B = x.shape[0]

    # Lane-aligned batch tiling; pad the batch with zero rows (sliced off at
    # the end, so the tail tile never stores garbage into the real output).
    B_pad = pl.cdiv(B, 128) * 128
    tb = min(tile_b, B_pad)
    B_pad = pl.cdiv(B_pad, tb) * tb
    if B_pad != B:
        x = jnp.pad(x, ((0, B_pad - B), (0, 0)))
    x = x.astype(cdt)

    grid = (B_pad // tb,)

    def full(a):
        # Whole-array block, same block for every grid step -> DMA'd once.
        return pl.BlockSpec(a.shape, lambda i, _nd=a.ndim: (0,) * _nd)

    out = pl.pallas_call(
        modelv_kernel,
        out_shape=jax.ShapeDtypeStruct((1, B_pad), jnp.float32),
        grid=grid,
        in_specs=[
            pl.BlockSpec((tb, STATNUM), lambda i: (i, 0)),   # batch-tiled input
            full(w1), full(b1), full(wh), full(bh), full(w2), full(b2),
        ],
        out_specs=pl.BlockSpec((1, tb), lambda i: (0, i)),   # lane-dense output
        compiler_params=pltpu.CompilerParams(
            dimension_semantics=("parallel",),               # megacore on v7x
        ),
    )(x, w1, b1, wh, bh, w2, b2)

    return out[0, :B].reshape(B, 1)


def init_params(key):
    """Raw (unpadded) params matching torch.nn.Linear init, stored as (in, out)."""
    ks = jax.random.split(key, 3)

    def lin(k, fan_in, fan_out):
        kw, kb = jax.random.split(k)
        bound = 1.0 / jnp.sqrt(jnp.float32(fan_in))
        w = jax.random.uniform(kw, (fan_in, fan_out), jnp.float32, -bound, bound)
        b = jax.random.uniform(kb, (fan_out,), jnp.float32, -bound, bound)
        return w, b

    w1, b1 = lin(ks[0], STATNUM, HIDDEN)
    hk = jax.random.split(ks[1], N_RES)
    wh_list, bh_list = [], []
    for i in range(N_RES):
        w, b = lin(hk[i], HIDDEN, HIDDEN)
        wh_list.append(w)
        bh_list.append(b)
    wh = jnp.stack(wh_list, axis=0)          # (6, 30, 30)
    bh = jnp.stack(bh_list, axis=0)          # (6, 30)
    w2, b2 = lin(ks[2], HIDDEN, 1)           # (30, 1), (1,)
    return (w1, b1, wh, bh, w2, b2)


def pad_params(raw):
    """Zero-pad hidden width 30 -> 32; numerics unchanged (padded lanes are 0)."""
    w1, b1, wh, bh, w2, b2 = raw
    p = HPAD - HIDDEN
    w1p = jnp.pad(w1, ((0, 0), (0, p)))                      # (STATNUM, HPAD)
    b1p = jnp.pad(b1, (0, p))[None, :]                       # (1, HPAD)
    whp = jnp.pad(wh, ((0, 0), (0, p), (0, p)))              # (N_RES, HPAD, HPAD)
    bhp = jnp.pad(bh, ((0, 0), (0, p)))[:, None, :]          # (N_RES, 1, HPAD)
    w2p = jnp.pad(w2[:, 0], (0, p))[None, :]                 # (1, HPAD)
    b2p = b2.reshape(1, 1)                                   # (1, 1)
    return (w1p, b1p, whp, bhp, w2p, b2p)


def to_compute_dtype(kparams, dtype):
    """bf16 MXU inputs on v6e/v7x; biases stay f32 (added to f32 accumulators)."""
    w1, b1, wh, bh, w2, b2 = kparams
    return (w1.astype(dtype), b1, wh.astype(dtype), bh, w2.astype(dtype), b2)


def modelv_reference(x, raw_params):
    w1, b1, wh, bh, w2, b2 = raw_params
    h = jnp.maximum(x @ w1 + b1, 0.0)
    for i in range(N_RES):
        h = h + jnp.maximum(h @ wh[i] + bh[i], 0.0)
    return h @ w2 + b2


if __name__ == "__main__":
    key = jax.random.PRNGKey(0)
    kp, kx = jax.random.split(key)
    raw = init_params(kp)
    kparams = pad_params(raw)

    B = 2
    x = jax.random.normal(kx, (B, STATNUM), jnp.float32)

    # f32 path (exact vs reference)
    out = modelv_forward(x, kparams)
    jax.block_until_ready(out)

    ref = modelv_reference(x, raw)
    assert out.shape == (B, 1)
    assert jnp.allclose(out, ref, atol=1e-5, rtol=1e-5), (out, ref)

    # bf16-input / f32-accumulate path (v6e/v7x MXU-native), looser tolerance.
    out_bf16 = modelv_forward(x, to_compute_dtype(kparams, jnp.bfloat16))
    jax.block_until_ready(out_bf16)
    assert jnp.allclose(out_bf16, ref, atol=5e-2, rtol=5e-2), (out_bf16, ref)

    print("KERNEL_OK")
</pallas_src>

<mosaic_0001>
module attributes {stable_mosaic.version = 11 : i64} {
  func.func @modelv_kernel(%arg0: i32, %arg1: memref<128x32xf32, #tpu.memory_space<vmem>>, %arg2: memref<32x32xf32, #tpu.memory_space<vmem>>, %arg3: memref<1x32xf32, #tpu.memory_space<vmem>>, %arg4: memref<6x32x32xf32, #tpu.memory_space<vmem>>, %arg5: memref<6x1x32xf32, #tpu.memory_space<vmem>>, %arg6: memref<1x32xf32, #tpu.memory_space<vmem>>, %arg7: memref<1x1xf32, #tpu.memory_space<vmem>>, %arg8: memref<1x128xf32, #tpu.memory_space<vmem>>) attributes {dimension_semantics = [#tpu.dimension_semantics<parallel>], iteration_bounds = array<i64: 1>, scalar_prefetch = 0 : i64, scratch_operands = 0 : i64, tpu.core_type = #tpu.core_type<tc>, window_params = [{transform_indices = @transform_0, window_bounds = array<i64: 128, 32>}, {pipeline_mode = #tpu.pipeline_mode<synchronous>, transform_indices = @transform_1, window_bounds = array<i64: 32, 32>}, {pipeline_mode = #tpu.pipeline_mode<synchronous>, transform_indices = @transform_2, window_bounds = array<i64: 1, 32>}, {pipeline_mode = #tpu.pipeline_mode<synchronous>, transform_indices = @transform_3, window_bounds = array<i64: 6, 32, 32>}, {pipeline_mode = #tpu.pipeline_mode<synchronous>, transform_indices = @transform_4, window_bounds = array<i64: 6, 1, 32>}, {pipeline_mode = #tpu.pipeline_mode<synchronous>, transform_indices = @transform_5, window_bounds = array<i64: 1, 32>}, {pipeline_mode = #tpu.pipeline_mode<synchronous>, transform_indices = @transform_6, window_bounds = array<i64: 1, 1>}, {transform_indices = @transform_7, window_bounds = array<i64: 1, 128>}]} {
    %c0 = arith.constant 0 : index
    %c0_0 = arith.constant 0 : index
    %0 = vector.load %arg1[%c0, %c0_0] : memref<128x32xf32, #tpu.memory_space<vmem>>, vector<128x32xf32>
    %c0_1 = arith.constant 0 : index
    %c0_2 = arith.constant 0 : index
    %1 = vector.load %arg2[%c0_1, %c0_2] : memref<32x32xf32, #tpu.memory_space<vmem>>, vector<32x32xf32>
    %cst = arith.constant dense<0.000000e+00> : vector<128x32xf32>
    %2 = tpu.matmul %0, %1, %cst {dimension_numbers = #tpu.dot_dimension_numbers<[1], [0], [0], [1], [0, 0, 1, 1], [], []>} : vector<128x32xf32>, vector<32x32xf32>, vector<128x32xf32> -> vector<128x32xf32>
    %c0_3 = arith.constant 0 : index
    %c0_4 = arith.constant 0 : index
    %3 = vector.load %arg3[%c0_3, %c0_4] : memref<1x32xf32, #tpu.memory_space<vmem>>, vector<1x32xf32>
    %4 = vector.broadcast %3 : vector<1x32xf32> to vector<128x32xf32>
    %5 = arith.addf %2, %4 : vector<128x32xf32>
    %cst_5 = arith.constant 0.000000e+00 : f32
    %6 = vector.broadcast %cst_5 : f32 to vector<128x32xf32>
    %7 = arith.maximumf %5, %6 : vector<128x32xf32>
    %c0_6 = arith.constant 0 : index
    %c0_7 = arith.constant 0 : index
    %c0_8 = arith.constant 0 : index
    %8 = vector.load %arg4[%c0_6, %c0_7, %c0_8] : memref<6x32x32xf32, #tpu.memory_space<vmem>>, vector<1x32x32xf32>
    %9 = vector.shape_cast %8 : vector<1x32x32xf32> to vector<32x32xf32>
    %cst_9 = arith.constant dense<0.000000e+00> : vector<128x32xf32>
    %10 = tpu.matmul %7, %9, %cst_9 {dimension_numbers = #tpu.dot_dimension_numbers<[1], [0], [0], [1], [0, 0, 1, 1], [], []>} : vector<128x32xf32>, vector<32x32xf32>, vector<128x32xf32> -> vector<128x32xf32>
    %c0_10 = arith.constant 0 : index
    %c0_11 = arith.constant 0 : index
    %c0_12 = arith.constant 0 : index
    %11 = vector.load %arg5[%c0_10, %c0_11, %c0_12] : memref<6x1x32xf32, #tpu.memory_space<vmem>>, vector<1x1x32xf32>
    %12 = vector.shape_cast %11 : vector<1x1x32xf32> to vector<1x32xf32>
    %13 = vector.broadcast %12 : vector<1x32xf32> to vector<128x32xf32>
    %14 = arith.addf %10, %13 : vector<128x32xf32>
    %cst_13 = arith.constant 0.000000e+00 : f32
    %15 = vector.broadcast %cst_13 : f32 to vector<128x32xf32>
    %16 = arith.maximumf %14, %15 : vector<128x32xf32>
    %17 = arith.addf %7, %16 : vector<128x32xf32>
    %c1 = arith.constant 1 : index
    %c0_14 = arith.constant 0 : index
    %c0_15 = arith.constant 0 : index
    %18 = vector.load %arg4[%c1, %c0_14, %c0_15] : memref<6x32x32xf32, #tpu.memory_space<vmem>>, vector<1x32x32xf32>
    %19 = vector.shape_cast %18 : vector<1x32x32xf32> to vector<32x32xf32>
    %cst_16 = arith.constant dense<0.000000e+00> : vector<128x32xf32>
    %20 = tpu.matmul %17, %19, %cst_16 {dimension_numbers = #tpu.dot_dimension_numbers<[1], [0], [0], [1], [0, 0, 1, 1], [], []>} : vector<128x32xf32>, vector<32x32xf32>, vector<128x32xf32> -> vector<128x32xf32>
    %c1_17 = arith.constant 1 : index
    %c0_18 = arith.constant 0 : index
    %c0_19 = arith.constant 0 : index
    %21 = vector.load %arg5[%c1_17, %c0_18, %c0_19] : memref<6x1x32xf32, #tpu.memory_space<vmem>>, vector<1x1x32xf32>
    %22 = vector.shape_cast %21 : vector<1x1x32xf32> to vector<1x32xf32>
    %23 = vector.broadcast %22 : vector<1x32xf32> to vector<128x32xf32>
    %24 = arith.addf %20, %23 : vector<128x32xf32>
    %cst_20 = arith.constant 0.000000e+00 : f32
    %25 = vector.broadcast %cst_20 : f32 to vector<128x32xf32>
    %26 = arith.maximumf %24, %25 : vector<128x32xf32>
    %27 = arith.addf %17, %26 : vector<128x32xf32>
    %c2 = arith.constant 2 : index
    %c0_21 = arith.constant 0 : index
    %c0_22 = arith.constant 0 : index
    %28 = vector.load %arg4[%c2, %c0_21, %c0_22] : memref<6x32x32xf32, #tpu.memory_space<vmem>>, vector<1x32x32xf32>
    %29 = vector.shape_cast %28 : vector<1x32x32xf32> to vector<32x32xf32>
    %cst_23 = arith.constant dense<0.000000e+00> : vector<128x32xf32>
    %30 = tpu.matmul %27, %29, %cst_23 {dimension_numbers = #tpu.dot_dimension_numbers<[1], [0], [0], [1], [0, 0, 1, 1], [], []>} : vector<128x32xf32>, vector<32x32xf32>, vector<128x32xf32> -> vector<128x32xf32>
    %c2_24 = arith.constant 2 : index
    %c0_25 = arith.constant 0 : index
    %c0_26 = arith.constant 0 : index
    %31 = vector.load %arg5[%c2_24, %c0_25, %c0_26] : memref<6x1x32xf32, #tpu.memory_space<vmem>>, vector<1x1x32xf32>
    %32 = vector.shape_cast %31 : vector<1x1x32xf32> to vector<1x32xf32>
    %33 = vector.broadcast %32 : vector<1x32xf32> to vector<128x32xf32>
    %34 = arith.addf %30, %33 : vector<128x32xf32>
    %cst_27 = arith.constant 0.000000e+00 : f32
    %35 = vector.broadcast %cst_27 : f32 to vector<128x32xf32>
    %36 = arith.maximumf %34, %35 : vector<128x32xf32>
    %37 = arith.addf %27, %36 : vector<128x32xf32>
    %c3 = arith.constant 3 : index
    %c0_28 = arith.constant 0 : index
    %c0_29 = arith.constant 0 : index
    %38 = vector.load %arg4[%c3, %c0_28, %c0_29] : memref<6x32x32xf32, #tpu.memory_space<vmem>>, vector<1x32x32xf32>
    %39 = vector.shape_cast %38 : vector<1x32x32xf32> to vector<32x32xf32>
    %cst_30 = arith.constant dense<0.000000e+00> : vector<128x32xf32>
    %40 = tpu.matmul %37, %39, %cst_30 {dimension_numbers = #tpu.dot_dimension_numbers<[1], [0], [0], [1], [0, 0, 1, 1], [], []>} : vector<128x32xf32>, vector<32x32xf32>, vector<128x32xf32> -> vector<128x32xf32>
    %c3_31 = arith.constant 3 : index
    %c0_32 = arith.constant 0 : index
    %c0_33 = arith.constant 0 : index
    %41 = vector.load %arg5[%c3_31, %c0_32, %c0_33] : memref<6x1x32xf32, #tpu.memory_space<vmem>>, vector<1x1x32xf32>
    %42 = vector.shape_cast %41 : vector<1x1x32xf32> to vector<1x32xf32>
    %43 = vector.broadcast %42 : vector<1x32xf32> to vector<128x32xf32>
    %44 = arith.addf %40, %43 : vector<128x32xf32>
    %cst_34 = arith.constant 0.000000e+00 : f32
    %45 = vector.broadcast %cst_34 : f32 to vector<128x32xf32>
    %46 = arith.maximumf %44, %45 : vector<128x32xf32>
    %47 = arith.addf %37, %46 : vector<128x32xf32>
    %c4 = arith.constant 4 : index
    %c0_35 = arith.constant 0 : index
    %c0_36 = arith.constant 0 : index
    %48 = vector.load %arg4[%c4, %c0_35, %c0_36] : memref<6x32x32xf32, #tpu.memory_space<vmem>>, vector<1x32x32xf32>
    %49 = vector.shape_cast %48 : vector<1x32x32xf32> to vector<32x32xf32>
    %cst_37 = arith.constant dense<0.000000e+00> : vector<128x32xf32>
    %50 = tpu.matmul %47, %49, %cst_37 {dimension_numbers = #tpu.dot_dimension_numbers<[1], [0], [0], [1], [0, 0, 1, 1], [], []>} : vector<128x32xf32>, vector<32x32xf32>, vector<128x32xf32> -> vector<128x32xf32>
    %c4_38 = arith.constant 4 : index
    %c0_39 = arith.constant 0 : index
    %c0_40 = arith.constant 0 : index
    %51 = vector.load %arg5[%c4_38, %c0_39, %c0_40] : memref<6x1x32xf32, #tpu.memory_space<vmem>>, vector<1x1x32xf32>
    %52 = vector.shape_cast %51 : vector<1x1x32xf32> to vector<1x32xf32>
    %53 = vector.broadcast %52 : vector<1x32xf32> to vector<128x32xf32>
    %54 = arith.addf %50, %53 : vector<128x32xf32>
    %cst_41 = arith.constant 0.000000e+00 : f32
    %55 = vector.broadcast %cst_41 : f32 to vector<128x32xf32>
    %56 = arith.maximumf %54, %55 : vector<128x32xf32>
    %57 = arith.addf %47, %56 : vector<128x32xf32>
    %c5 = arith.constant 5 : index
    %c0_42 = arith.constant 0 : index
    %c0_43 = arith.constant 0 : index
    %58 = vector.load %arg4[%c5, %c0_42, %c0_43] : memref<6x32x32xf32, #tpu.memory_space<vmem>>, vector<1x32x32xf32>
    %59 = vector.shape_cast %58 : vector<1x32x32xf32> to vector<32x32xf32>
    %cst_44 = arith.constant dense<0.000000e+00> : vector<128x32xf32>
    %60 = tpu.matmul %57, %59, %cst_44 {dimension_numbers = #tpu.dot_dimension_numbers<[1], [0], [0], [1], [0, 0, 1, 1], [], []>} : vector<128x32xf32>, vector<32x32xf32>, vector<128x32xf32> -> vector<128x32xf32>
    %c5_45 = arith.constant 5 : index
    %c0_46 = arith.constant 0 : index
    %c0_47 = arith.constant 0 : index
    %61 = vector.load %arg5[%c5_45, %c0_46, %c0_47] : memref<6x1x32xf32, #tpu.memory_space<vmem>>, vector<1x1x32xf32>
    %62 = vector.shape_cast %61 : vector<1x1x32xf32> to vector<1x32xf32>
    %63 = vector.broadcast %62 : vector<1x32xf32> to vector<128x32xf32>
    %64 = arith.addf %60, %63 : vector<128x32xf32>
    %cst_48 = arith.constant 0.000000e+00 : f32
    %65 = vector.broadcast %cst_48 : f32 to vector<128x32xf32>
    %66 = arith.maximumf %64, %65 : vector<128x32xf32>
    %67 = arith.addf %57, %66 : vector<128x32xf32>
    %c0_49 = arith.constant 0 : index
    %c0_50 = arith.constant 0 : index
    %68 = vector.load %arg6[%c0_49, %c0_50] : memref<1x32xf32, #tpu.memory_space<vmem>>, vector<1x32xf32>
    %69 = vector.broadcast %68 : vector<1x32xf32> to vector<128x32xf32>
    %70 = arith.mulf %67, %69 : vector<128x32xf32>
    %cst_51 = arith.constant dense<0.000000e+00> : vector<128xf32>
    %71 = vector.multi_reduction <add>, %70, %cst_51 [1] : vector<128x32xf32> to vector<128xf32>
    %72 = vector.shape_cast %71 : vector<128xf32> to vector<1x128xf32>
    %c0_52 = arith.constant 0 : index
    %c0_53 = arith.constant 0 : index
    %73 = vector.load %arg7[%c0_52, %c0_53] : memref<1x1xf32, #tpu.memory_space<vmem>>, vector<1x1xf32>
    %74 = vector.broadcast %73 : vector<1x1xf32> to vector<1x128xf32>
    %75 = arith.addf %72, %74 : vector<1x128xf32>
    %c0_54 = arith.constant 0 : index
    %c0_55 = arith.constant 0 : index
    %76 = vector.load %arg8[%c0_54, %c0_55] : memref<1x128xf32, #tpu.memory_space<vmem>>, vector<1x128xf32>
    tpu.vector_store %arg8[%c0_54, %c0_55], %75 {strides = array<i32>} : memref<1x128xf32, #tpu.memory_space<vmem>>, vector<1x128xf32>,
    return
  }
  func.func @transform_0(%arg0: i32) -> (i32, i32) {
    %c0_i32 = arith.constant 0 : i32
    %c0_i32_0 = arith.constant 0 : i32
    return %arg0, %c0_i32 : i32, i32
  }
  func.func @transform_1(%arg0: i32) -> (i32, i32) {
    %c0_i32 = arith.constant 0 : i32
    %c0_i32_0 = arith.constant 0 : i32
    %c0_i32_1 = arith.constant 0 : i32
    return %c0_i32, %c0_i32_0 : i32, i32
  }
  func.func @transform_2(%arg0: i32) -> (i32, i32) {
    %c0_i32 = arith.constant 0 : i32
    %c0_i32_0 = arith.constant 0 : i32
    %c0_i32_1 = arith.constant 0 : i32
    return %c0_i32, %c0_i32_0 : i32, i32
  }
  func.func @transform_3(%arg0: i32) -> (i32, i32, i32) {
    %c0_i32 = arith.constant 0 : i32
    %c0_i32_0 = arith.constant 0 : i32
    %c0_i32_1 = arith.constant 0 : i32
    %c0_i32_2 = arith.constant 0 : i32
    return %c0_i32, %c0_i32_0, %c0_i32_1 : i32, i32, i32
  }
  func.func @transform_4(%arg0: i32) -> (i32, i32, i32) {
    %c0_i32 = arith.constant 0 : i32
    %c0_i32_0 = arith.constant 0 : i32
    %c0_i32_1 = arith.constant 0 : i32
    %c0_i32_2 = arith.constant 0 : i32
    return %c0_i32, %c0_i32_0, %c0_i32_1 : i32, i32, i32
  }
  func.func @transform_5(%arg0: i32) -> (i32, i32) {
    %c0_i32 = arith.constant 0 : i32
    %c0_i32_0 = arith.constant 0 : i32
    %c0_i32_1 = arith.constant 0 : i32
    return %c0_i32, %c0_i32_0 : i32, i32
  }
  func.func @transform_6(%arg0: i32) -> (i32, i32) {
    %c0_i32 = arith.constant 0 : i32
    %c0_i32_0 = arith.constant 0 : i32
    %c0_i32_1 = arith.constant 0 : i32
    return %c0_i32, %c0_i32_0 : i32, i32
  }
  func.func @transform_7(%arg0: i32) -> (i32, i32) {
    %c0_i32 = arith.constant 0 : i32
    %c0_i32_0 = arith.constant 0 : i32
    return %c0_i32, %arg0 : i32, i32
  }
}

</mosaic_0001>

<llo_original>
// kernel: tpu_custom_call.1
$region0: #{tpu_custom_call.1}
  #allocation0 [shape = 'u32[]', space=smem, size = 0x4, offset = 0x4, fixed_abs, tag = 'smem constant byte address 0x4 - core index']
  #allocation1 [shape = 'u32[144,128]{1,0:T(1,128)}', space=vmem, size = 0x12000, scoped, tag = 'internal scratch']
  #allocation2 [shape = 'f32[1,1]{1,0:T(1,128)S(1)}', space=vmem, size = 0x200, scoped, tag = 'scoped memory for tpu_custom_call.1']
  %s0 = inlined_call_operand.vmem [shape: f32[128,32], index: 0, kind: input, shape index: {}]
  %s1 = inlined_call_operand.vmem [shape: f32[32,32], index: 1, kind: input, shape index: {}]
  %s2 = inlined_call_operand.vmem [shape: f32[1,32], index: 2, kind: input, shape index: {}]
  %s3 = inlined_call_operand.hbm [shape: f32[6,32,32], index: 3, kind: input, shape index: {}]
  %s4 = inlined_call_operand.vmem [shape: f32[6,1,32], index: 4, kind: input, shape index: {}]
  %s5 = inlined_call_operand.vmem [shape: f32[1,32], index: 5, kind: input, shape index: {}]
  %s6 = inlined_call_operand.<no memory space> [shape: f32[1,1], index: 6, kind: input, shape index: {}]
  %s7 = inlined_call_operand.hbm [shape: f32[1,128], index: 7, kind: output, shape index: {}]
  %s8 = sld [smem:[#allocation0]]
  $region42: #{tpu_custom_call.1} parent=0
    _
  %s10 = ssub.s32 1, %s8
  %s11 = scalar_select 0, %s10, %s8
  %v12 = vstv %s6
  %13 = vst [vmem:[#allocation2] sm:$0x1] %v12
  $region1: #{tpu_custom_call.1} parent=0
    #allocation3 [shape = 'u8[98304]{0}', space=vmem, size = 0x18000, scoped, tag = 'input window, operand 3, single buffered']
    #allocation4 [shape = 's32[1]{0}', space=sflag, size = 0x4, scoped, tag = 'scoped memory for tpu_custom_call.1']
    #allocation5 [shape = 's32[1]{0}', space=sflag, size = 0x4, scoped, tag = 'scoped memory for tpu_custom_call.1']
    #allocation6 [shape = 'u8[512]{0}', space=vmem, size = 0x400, scoped, tag = 'output window, operand 0, single buffered']
    %14 = vsyncpa [#allocation4], 0
    %15 = vsyncpa [#allocation5], 0
    // Predicated region
    $region2: #{tpu_custom_call.1} parent=1 // pred_check
      _
    $region3: #{tpu_custom_call.1} parent=1 // pred_check_branch
      %17 = sbr.rel (0) target = $region5
    $region4: #{tpu_custom_call.1} parent=1 // pred_region
      _
    $region5: #{tpu_custom_call.1} parent=1 // pred_fallthru
      _
    // Predicated region
    $region6: #{tpu_custom_call.1} parent=1 // pred_check
      _
    $region7: #{tpu_custom_call.1} parent=1 // pred_check_branch
      %19 = sbr.rel (0) target = $region9
    $region8: #{tpu_custom_call.1} parent=1 // pred_region
      _
    $region9: #{tpu_custom_call.1} parent=1 // pred_fallthru
      _
    // Predicated region
    $region10: #{tpu_custom_call.1} parent=1 // pred_check
      _
    $region11: #{tpu_custom_call.1} parent=1 // pred_check_branch
      %21 = sbr.rel (0) target = $region13
    $region12: #{tpu_custom_call.1} parent=1 // pred_region
      _
    $region13: #{tpu_custom_call.1} parent=1 // pred_fallthru
      _
    // Predicated region
    $region14: #{tpu_custom_call.1} parent=1 // pred_check
      _
    $region15: #{tpu_custom_call.1} parent=1 // pred_check_branch
      %23 = sbr.rel (0) target = $region17
    $region16: #{tpu_custom_call.1} parent=1 // pred_region
      %s25 = ssub.s32 3072, 3072
      %26 = vsyncadd [#allocation4], %s25
      %s27 = sshll.u32 [#allocation3], 4
      %s28 = int_to_ptr.vmem [resolvable:$true] %s27
      %33 = dma.hbm_to_vmem [thread:$0]  %s3, 3072, %s28, [#allocation4], 128, 128, 8
    $region17: #{tpu_custom_call.1} parent=1 // pred_fallthru
      _
    // Predicated region
    $region18: #{tpu_custom_call.1} parent=1 // pred_check
      _
    $region19: #{tpu_custom_call.1} parent=1 // pred_check_branch
      %35 = sbr.rel (0) target = $region21
    $region20: #{tpu_custom_call.1} parent=1 // pred_region
      _
    $region21: #{tpu_custom_call.1} parent=1 // pred_fallthru
      _
    // Predicated region
    $region22: #{tpu_custom_call.1} parent=1 // pred_check
      _
    $region23: #{tpu_custom_call.1} parent=1 // pred_check_branch
      %37 = sbr.rel (0) target = $region25
    $region24: #{tpu_custom_call.1} parent=1 // pred_region
      _
    $region25: #{tpu_custom_call.1} parent=1 // pred_fallthru
      _
    // Predicated region
    $region26: #{tpu_custom_call.1} parent=1 // pred_check
      _
    $region27: #{tpu_custom_call.1} parent=1 // pred_check_branch
      %39 = sbr.rel (0) target = $region29
    $region28: #{tpu_custom_call.1} parent=1 // pred_region
      _
    $region29: #{tpu_custom_call.1} parent=1 // pred_fallthru
      _
    // Predicated region
    $region30: #{tpu_custom_call.1} parent=1 // pred_check
      _
    $region31: #{tpu_custom_call.1} parent=1 // pred_check_branch
      %41 = sbr.rel (0) target = $region33
    $region32: #{tpu_custom_call.1} parent=1 // pred_region
      %42 = dma.done [#allocation4], 3072
    $region33: #{tpu_custom_call.1} parent=1 // pred_fallthru
      _
    %v43 = vld [vmem:[%s0] sm:$0xff]
    %v44 = vld [vmem:[%s0 + $0x8] sm:$0xff]
    %v45 = vld [vmem:[%s0 + $0x10] sm:$0xff]
    %v46 = vld [vmem:[%s0 + $0x18] sm:$0xff]
    %v47 = vld [vmem:[%s0 + $0x20] sm:$0xff]
    %v48 = vld [vmem:[%s0 + $0x28] sm:$0xff]
    %v49 = vld [vmem:[%s0 + $0x30] sm:$0xff]
    %v50 = vld [vmem:[%s0 + $0x38] sm:$0xff]
    %v51 = vld [vmem:[%s0 + $0x40] sm:$0xff]
    %v52 = vld [vmem:[%s0 + $0x48] sm:$0xff]
    %v53 = vld [vmem:[%s0 + $0x50] sm:$0xff]
    %v54 = vld [vmem:[%s0 + $0x58] sm:$0xff]
    %v55 = vld [vmem:[%s0 + $0x60] sm:$0xff]
    %v56 = vld [vmem:[%s0 + $0x68] sm:$0xff]
    %v57 = vld [vmem:[%s0 + $0x70] sm:$0xff]
    %v58 = vld [vmem:[%s0 + $0x78] sm:$0xff]
    %v59 = vld [vmem:[%s1] sm:$0xff]
    %v60 = vld [vmem:[%s1 + $0x8] sm:$0xff]
    %v61 = vld [vmem:[%s1 + $0x10] sm:$0xff]
    %v62 = vld [vmem:[%s1 + $0x18] sm:$0xff]
    %v63 = vld [vmem:[%s2] sm:$0x1]
    %v65 = vlaneseq
    %v66 = vshrl.u32 %v65, 7
    %v67 = vsub.s32 0, %v66
    %v68 = vrot.slane %v63, %v67
    %vm70 = vcmask 261120
    %v72 = vsel %vm70, %v43, 0
    %v75 = vsel %vm70, %v44, 0
    %v78 = vsel %vm70, %v45, 0
    %v81 = vsel %vm70, %v46, 0
    %v84 = vsel %vm70, %v47, 0
    %v87 = vsel %vm70, %v48, 0
    %v90 = vsel %vm70, %v49, 0
    %v93 = vsel %vm70, %v50, 0
    %v96 = vsel %vm70, %v51, 0
    %v99 = vsel %vm70, %v52, 0
    %v102 = vsel %vm70, %v53, 0
    %v105 = vsel %vm70, %v54, 0
    %v108 = vsel %vm70, %v55, 0
    %v111 = vsel %vm70, %v56, 0
    %v114 = vsel %vm70, %v57, 0
    %v117 = vsel %vm70, %v58, 0
    %119 = vmatprep.subr.mxu0 0.0
    %120 = vmatpush1.msra.mxu0 %v59
    %121 = vmatprep.subr.mxu0 0.0
    %122 = vmatpush1.msra.mxu0 %v60
    %123 = vmatprep.subr.mxu0 0.0
    %124 = vmatpush1.msra.mxu0 %v61
    %125 = vmatprep.subr.mxu0 0.0
    %126 = vmatpush1.msra.mxu0 %v62
    %127 = vmatprep.subr.mxu0 0.0
    %128 = vmatpush1.msra.mxu0 0.0
    %129 = vmatprep.subr.mxu0 0.0
    %130 = vmatpush1.msra.mxu0 0.0
    %131 = vmatprep.subr.mxu0 0.0
    %132 = vmatpush1.msra.mxu0 0.0
    %133 = vmatprep.subr.mxu0 0.0
    %134 = vmatpush1.msra.mxu0 0.0
    %135 = vmatprep.subr.mxu0 0.0
    %136 = vmatpush1.msra.mxu0 0.0
    %137 = vmatprep.subr.mxu0 0.0
    %138 = vmatpush1.msra.mxu0 0.0
    %139 = vmatprep.subr.mxu0 0.0
    %140 = vmatpush1.msra.mxu0 0.0
    %141 = vmatprep.subr.mxu0 0.0
    %142 = vmatpush1.msra.mxu0 0.0
    %143 = vmatprep.subr.mxu0 0.0
    %144 = vmatpush1.msra.mxu0 0.0
    %145 = vmatprep.subr.mxu0 0.0
    %146 = vmatpush1.msra.mxu0 0.0
    %147 = vmatprep.subr.mxu0 0.0
    %148 = vmatpush1.msra.mxu0 0.0
    %149 = vmatprep.subr.mxu0 0.0
    %150 = vmatpush1.msra.mxu0 0.0
    %151 = vmatprep.subr.mxu0 0.0
    %152 = vmatpush1.msra.mxu0 0.0
    %153 = vmatprep.subr.mxu0 0.0
    %154 = vmatpush1.msra.mxu0 0.0
    %155 = vmatprep.subr.mxu0 0.0
    %156 = vmatpush1.msra.mxu0 0.0
    %157 = vmatprep.subr.mxu0 0.0
    %158 = vmatpush1.msra.mxu0 0.0
    %159 = vmatprep.subr.mxu0 0.0
    %160 = vmatpush1.msra.mxu0 0.0
    %161 = vmatprep.subr.mxu0 0.0
    %162 = vmatpush1.msra.mxu0 0.0
    %163 = vmatprep.subr.mxu0 0.0
    %164 = vmatpush1.msra.mxu0 0.0
    %165 = vmatprep.subr.mxu0 0.0
    %166 = vmatpush1.msra.mxu0 0.0
    %167 = vmatprep.subr.mxu0 0.0
    %168 = vmatpush1.msra.mxu0 0.0
    %169 = vmatprep.subr.mxu0 0.0
    %170 = vmatpush1.msra.mxu0 0.0
    %171 = vmatprep.subr.mxu0 0.0
    %172 = vmatpush1.msra.mxu0 0.0
    %173 = vmatprep.subr.mxu0 0.0
    %174 = vmatpush1.msra.mxu0 0.0
    %175 = vmatprep.subr.mxu0 0.0
    %176 = vmatpush1.msra.mxu0 0.0
    %177 = vmatprep.subr.mxu0 0.0
    %178 = vmatpush1.msra.mxu0 0.0
    %179 = vmatprep.subr.mxu0 0.0
    %180 = vmatpush1.msra.mxu0 0.0
    %181 = vmatprep.subr.mxu0 0.0
    %182 = vmatpush1.msra.mxu0 0.0
    %183 = vmatprep.mubr.f32.mxu0 0.0
    %184 = vmatmul.mubr.f32.gmra.mrb[0].mxu0 %v72
    %v185 = vpop.f32.mrb[0].mxu0
    %v186 = vadd.f32 %v68, %v185
    %v187 = vpop.f32.mrb[0].mxu0
    %188 = vmatprep.mubr.f32.mxu0 0.0
    %189 = vmatmul.mubr.f32.gmra.mrb[0].mxu0 %v75
    %v190 = vpop.f32.mrb[0].mxu0
    %v191 = vadd.f32 %v68, %v190
    %v192 = vpop.f32.mrb[0].mxu0
    %193 = vmatprep.mubr.f32.mxu0 0.0
    %194 = vmatmul.mubr.f32.gmra.mrb[0].mxu0 %v78
    %v195 = vpop.f32.mrb[0].mxu0
    %v196 = vadd.f32 %v68, %v195
    %v197 = vpop.f32.mrb[0].mxu0
    %198 = vmatprep.mubr.f32.mxu0 0.0
    %199 = vmatmul.mubr.f32.gmra.mrb[0].mxu0 %v81
    %v200 = vpop.f32.mrb[0].mxu0
    %v201 = vadd.f32 %v68, %v200
    %v202 = vpop.f32.mrb[0].mxu0
    %203 = vmatprep.mubr.f32.mxu0 0.0
    %204 = vmatmul.mubr.f32.gmra.mrb[0].mxu0 %v84
    %v205 = vpop.f32.mrb[0].mxu0
    %v206 = vadd.f32 %v68, %v205
    %v207 = vpop.f32.mrb[0].mxu0
    %208 = vmatprep.mubr.f32.mxu0 0.0
    %209 = vmatmul.mubr.f32.gmra.mrb[0].mxu0 %v87
    %v210 = vpop.f32.mrb[0].mxu0
    %v211 = vadd.f32 %v68, %v210
    %v212 = vpop.f32.mrb[0].mxu0
    %213 = vmatprep.mubr.f32.mxu0 0.0
    %214 = vmatmul.mubr.f32.gmra.mrb[0].mxu0 %v90
    %v215 = vpop.f32.mrb[0].mxu0
    %v216 = vadd.f32 %v68, %v215
    %v217 = vpop.f32.mrb[0].mxu0
    %218 = vmatprep.mubr.f32.mxu0 0.0
    %219 = vmatmul.mubr.f32.gmra.mrb[0].mxu0 %v93
    %v220 = vpop.f32.mrb[0].mxu0
    %v221 = vadd.f32 %v68, %v220
    %v222 = vpop.f32.mrb[0].mxu0
    %223 = vmatprep.mubr.f32.mxu0 0.0
    %224 = vmatmul.mubr.f32.gmra.mrb[0].mxu0 %v96
    %v225 = vpop.f32.mrb[0].mxu0
    %v226 = vadd.f32 %v68, %v225
    %v227 = vpop.f32.mrb[0].mxu0
    %228 = vmatprep.mubr.f32.mxu0 0.0
    %229 = vmatmul.mubr.f32.gmra.mrb[0].mxu0 %v99
    %v230 = vpop.f32.mrb[0].mxu0
    %v231 = vadd.f32 %v68, %v230
    %v232 = vpop.f32.mrb[0].mxu0
    %233 = vmatprep.mubr.f32.mxu0 0.0
    %234 = vmatmul.mubr.f32.gmra.mrb[0].mxu0 %v102
    %v235 = vpop.f32.mrb[0].mxu0
    %v236 = vadd.f32 %v68, %v235
    %v237 = vpop.f32.mrb[0].mxu0
    %238 = vmatprep.mubr.f32.mxu0 0.0
    %239 = vmatmul.mubr.f32.gmra.mrb[0].mxu0 %v105
    %v240 = vpop.f32.mrb[0].mxu0
    %v241 = vadd.f32 %v68, %v240
    %v242 = vpop.f32.mrb[0].mxu0
    %243 = vmatprep.mubr.f32.mxu0 0.0
    %244 = vmatmul.mubr.f32.gmra.mrb[0].mxu0 %v108
    %v245 = vpop.f32.mrb[0].mxu0
    %v246 = vadd.f32 %v68, %v245
    %v247 = vpop.f32.mrb[0].mxu0
    %248 = vmatprep.mubr.f32.mxu0 0.0
    %249 = vmatmul.mubr.f32.gmra.mrb[0].mxu0 %v111
    %v250 = vpop.f32.mrb[0].mxu0
    %v251 = vadd.f32 %v68, %v250
    %v252 = vpop.f32.mrb[0].mxu0
    %253 = vmatprep.mubr.f32.mxu0 0.0
    %254 = vmatmul.mubr.f32.gmra.mrb[0].mxu0 %v114
    %v255 = vpop.f32.mrb[0].mxu0
    %v256 = vadd.f32 %v68, %v255
    %v257 = vpop.f32.mrb[0].mxu0
    %258 = vmatprep.mubr.f32.mxu0 0.0
    %259 = vmatmul.mubr.f32.gmra.mrb[0].mxu0 %v117
    %v260 = vpop.f32.mrb[0].mxu0
    %v261 = vadd.f32 %v68, %v260
    %v262 = vpop.f32.mrb[0].mxu0
    %263 = vdwg.mxu0
    %v264 = vmax.f32 %v186, 0.0
    %v265 = vmax.f32 %v191, 0.0
    %v266 = vmax.f32 %v196, 0.0
    %v267 = vmax.f32 %v201, 0.0
    %v268 = vmax.f32 %v206, 0.0
    %v269 = vmax.f32 %v211, 0.0
    %v270 = vmax.f32 %v216, 0.0
    %v271 = vmax.f32 %v221, 0.0
    %v272 = vmax.f32 %v226, 0.0
    %v273 = vmax.f32 %v231, 0.0
    %v274 = vmax.f32 %v236, 0.0
    %v275 = vmax.f32 %v241, 0.0
    %v276 = vmax.f32 %v246, 0.0
    %v277 = vmax.f32 %v251, 0.0
    %v278 = vmax.f32 %v256, 0.0
    %v279 = vmax.f32 %v261, 0.0
    %v280 = vld [vmem:[#allocation3] sm:$0xff]
    %v281 = vld [vmem:[#allocation3 + $0x8] sm:$0xff]
    %v282 = vld [vmem:[#allocation3 + $0x10] sm:$0xff]
    %v283 = vld [vmem:[#allocation3 + $0x18] sm:$0xff]
    %v284 = vld [vmem:[%s4] sm:$0x1]
    %v286 = vlaneseq
    %v287 = vshrl.u32 %v286, 7
    %v288 = vsub.s32 0, %v287
    %v289 = vrot.slane %v284, %v288
    %v292 = vsel %vm70, %v264, 0
    %v295 = vsel %vm70, %v265, 0
    %v298 = vsel %vm70, %v266, 0
    %v301 = vsel %vm70, %v267, 0
    %v304 = vsel %vm70, %v268, 0
    %v307 = vsel %vm70, %v269, 0
    %v310 = vsel %vm70, %v270, 0
    %v313 = vsel %vm70, %v271, 0
    %v316 = vsel %vm70, %v272, 0
    %v319 = vsel %vm70, %v273, 0
    %v322 = vsel %vm70, %v274, 0
    %v325 = vsel %vm70, %v275, 0
    %v328 = vsel %vm70, %v276, 0
    %v331 = vsel %vm70, %v277, 0
    %v334 = vsel %vm70, %v278, 0
    %v337 = vsel %vm70, %v279, 0
    %339 = vmatprep.subr.mxu0 0.0
    %340 = vmatpush1.msra.mxu0 %v280
    %341 = vmatprep.subr.mxu0 0.0
    %342 = vmatpush1.msra.mxu0 %v281
    %343 = vmatprep.subr.mxu0 0.0
    %344 = vmatpush1.msra.mxu0 %v282
    %345 = vmatprep.subr.mxu0 0.0
    %346 = vmatpush1.msra.mxu0 %v283
    %347 = vmatprep.subr.mxu0 0.0
    %348 = vmatpush1.msra.mxu0 0.0
    %349 = vmatprep.subr.mxu0 0.0
    %350 = vmatpush1.msra.mxu0 0.0
    %351 = vmatprep.subr.mxu0 0.0
    %352 = vmatpush1.msra.mxu0 0.0
    %353 = vmatprep.subr.mxu0 0.0
    %354 = vmatpush1.msra.mxu0 0.0
    %355 = vmatprep.subr.mxu0 0.0
    %356 = vmatpush1.msra.mxu0 0.0
    %357 = vmatprep.subr.mxu0 0.0
    %358 = vmatpush1.msra.mxu0 0.0
    %359 = vmatprep.subr.mxu0 0.0
    %360 = vmatpush1.msra.mxu0 0.0
    %361 = vmatprep.subr.mxu0 0.0
    %362 = vmatpush1.msra.mxu0 0.0
    %363 = vmatprep.subr.mxu0 0.0
    %364 = vmatpush1.msra.mxu0 0.0
    %365 = vmatprep.subr.mxu0 0.0
    %366 = vmatpush1.msra.mxu0 0.0
    %367 = vmatprep.subr.mxu0 0.0
    %368 = vmatpush1.msra.mxu0 0.0
    %369 = vmatprep.subr.mxu0 0.0
    %370 = vmatpush1.msra.mxu0 0.0
    %371 = vmatprep.subr.mxu0 0.0
    %372 = vmatpush1.msra.mxu0 0.0
    %373 = vmatprep.subr.mxu0 0.0
    %374 = vmatpush1.msra.mxu0 0.0
    %375 = vmatprep.subr.mxu0 0.0
    %376 = vmatpush1.msra.mxu0 0.0
    %377 = vmatprep.subr.mxu0 0.0
    %378 = vmatpush1.msra.mxu0 0.0
    %379 = vmatprep.subr.mxu0 0.0
    %380 = vmatpush1.msra.mxu0 0.0
    %381 = vmatprep.subr.mxu0 0.0
    %382 = vmatpush1.msra.mxu0 0.0
    %383 = vmatprep.subr.mxu0 0.0
    %384 = vmatpush1.msra.mxu0 0.0
    %385 = vmatprep.subr.mxu0 0.0
    %386 = vmatpush1.msra.mxu0 0.0
    %387 = vmatprep.subr.mxu0 0.0
    %388 = vmatpush1.msra.mxu0 0.0
    %389 = vmatprep.subr.mxu0 0.0
    %390 = vmatpush1.msra.mxu0 0.0
    %391 = vmatprep.subr.mxu0 0.0
    %392 = vmatpush1.msra.mxu0 0.0
    %393 = vmatprep.subr.mxu0 0.0
    %394 = vmatpush1.msra.mxu0 0.0
    %395 = vmatprep.subr.mxu0 0.0
    %396 = vmatpush1.msra.mxu0 0.0
    %397 = vmatprep.subr.mxu0 0.0
    %398 = vmatpush1.msra.mxu0 0.0
    %399 = vmatprep.subr.mxu0 0.0
    %400 = vmatpush1.msra.mxu0 0.0
    %401 = vmatprep.subr.mxu0 0.0
    %402 = vmatpush1.msra.mxu0 0.0
    %403 = vmatprep.mubr.f32.mxu0 0.0
    %404 = vmatmul.mubr.f32.gmra.mrb[0].mxu0 %v292
    %v405 = vpop.f32.mrb[0].mxu0
    %v406 = vadd.f32 %v289, %v405
    %v407 = vpop.f32.mrb[0].mxu0
    %408 = vmatprep.mubr.f32.mxu0 0.0
    %409 = vmatmul.mubr.f32.gmra.mrb[0].mxu0 %v295
    %v410 = vpop.f32.mrb[0].mxu0
    %v411 = vadd.f32 %v289, %v410
    %v412 = vpop.f32.mrb[0].mxu0
    %413 = vmatprep.mubr.f32.mxu0 0.0
    %414 = vmatmul.mubr.f32.gmra.mrb[0].mxu0 %v298
    %v415 = vpop.f32.mrb[0].mxu0
    %v416 = vadd.f32 %v289, %v415
    %v417 = vpop.f32.mrb[0].mxu0
    %418 = vmatprep.mubr.f32.mxu0 0.0
    %419 = vmatmul.mubr.f32.gmra.mrb[0].mxu0 %v301
    %v420 = vpop.f32.mrb[0].mxu0
    %v421 = vadd.f32 %v289, %v420
    %v422 = vpop.f32.mrb[0].mxu0
    %423 = vmatprep.mubr.f32.mxu0 0.0
    %424 = vmatmul.mubr.f32.gmra.mrb[0].mxu0 %v304
    %v425 = vpop.f32.mrb[0].mxu0
    %v426 = vadd.f32 %v289, %v425
    %v427 = vpop.f32.mrb[0].mxu0
    %428 = vmatprep.mubr.f32.mxu0 0.0
    %429 = vmatmul.mubr.f32.gmra.mrb[0].mxu0 %v307
    %v430 = vpop.f32.mrb[0].mxu0
    %v431 = vadd.f32 %v289, %v430
    %v432 = vpop.f32.mrb[0].mxu0
    %433 = vmatprep.mubr.f32.mxu0 0.0
    %434 = vmatmul.mubr.f32.gmra.mrb[0].mxu0 %v310
    %v435 = vpop.f32.mrb[0].mxu0
    %v436 = vadd.f32 %v289, %v435
    %v437 = vpop.f32.mrb[0].mxu0
    %438 = vmatprep.mubr.f32.mxu0 0.0
    %439 = vmatmul.mubr.f32.gmra.mrb[0].mxu0 %v313
    %v440 = vpop.f32.mrb[0].mxu0
    %v441 = vadd.f32 %v289, %v440
    %v442 = vpop.f32.mrb[0].mxu0
    %443 = vmatprep.mubr.f32.mxu0 0.0
    %444 = vmatmul.mubr.f32.gmra.mrb[0].mxu0 %v316
    %v445 = vpop.f32.mrb[0].mxu0
    %v446 = vadd.f32 %v289, %v445
    %v447 = vpop.f32.mrb[0].mxu0
    %448 = vmatprep.mubr.f32.mxu0 0.0
    %449 = vmatmul.mubr.f32.gmra.mrb[0].mxu0 %v319
    %v450 = vpop.f32.mrb[0].mxu0
    %v451 = vadd.f32 %v289, %v450
    %v452 = vpop.f32.mrb[0].mxu0
    %453 = vmatprep.mubr.f32.mxu0 0.0
    %454 = vmatmul.mubr.f32.gmra.mrb[0].mxu0 %v322
    %v455 = vpop.f32.mrb[0].mxu0
    %v456 = vadd.f32 %v289, %v455
    %v457 = vpop.f32.mrb[0].mxu0
    %458 = vmatprep.mubr.f32.mxu0 0.0
    %459 = vmatmul.mubr.f32.gmra.mrb[0].mxu0 %v325
    %v460 = vpop.f32.mrb[0].mxu0
    %v461 = vadd.f32 %v289, %v460
    %v462 = vpop.f32.mrb[0].mxu0
    %463 = vmatprep.mubr.f32.mxu0 0.0
    %464 = vmatmul.mubr.f32.gmra.mrb[0].mxu0 %v328
    %v465 = vpop.f32.mrb[0].mxu0
    %v466 = vadd.f32 %v289, %v465
    %v467 = vpop.f32.mrb[0].mxu0
    %468 = vmatprep.mubr.f32.mxu0 0.0
    %469 = vmatmul.mubr.f32.gmra.mrb[0].mxu0 %v331
    %v470 = vpop.f32.mrb[0].mxu0
    %v471 = vadd.f32 %v289, %v470
    %v472 = vpop.f32.mrb[0].mxu0
    %473 = vmatprep.mubr.f32.mxu0 0.0
    %474 = vmatmul.mubr.f32.gmra.mrb[0].mxu0 %v334
    %v475 = vpop.f32.mrb[0].mxu0
    %v476 = vadd.f32 %v289, %v475
    %v477 = vpop.f32.mrb[0].mxu0
    %478 = vmatprep.mubr.f32.mxu0 0.0
    %479 = vmatmul.mubr.f32.gmra.mrb[0].mxu0 %v337
    %v480 = vpop.f32.mrb[0].mxu0
    %v481 = vadd.f32 %v289, %v480
    %v482 = vpop.f32.mrb[0].mxu0
    %483 = vdwg.mxu0
    %v484 = vmax.f32 %v406, 0.0
    %v485 = vmax.f32 %v411, 0.0
    %v486 = vmax.f32 %v416, 0.0
    %v487 = vmax.f32 %v421, 0.0
    %v488 = vmax.f32 %v426, 0.0
    %v489 = vmax.f32 %v431, 0.0
    %v490 = vmax.f32 %v436, 0.0
    %v491 = vmax.f32 %v441, 0.0
    %v492 = vmax.f32 %v446, 0.0
    %v493 = vmax.f32 %v451, 0.0
    %v494 = vmax.f32 %v456, 0.0
    %v495 = vmax.f32 %v461, 0.0
    %v496 = vmax.f32 %v466, 0.0
    %v497 = vmax.f32 %v471, 0.0
    %v498 = vmax.f32 %v476, 0.0
    %v499 = vmax.f32 %v481, 0.0
    %v500 = vadd.f32 %v264, %v484
    %v501 = vadd.f32 %v265, %v485
    %v502 = vadd.f32 %v266, %v486
    %v503 = vadd.f32 %v267, %v487
    %v504 = vadd.f32 %v268, %v488
    %v505 = vadd.f32 %v269, %v489
    %v506 = vadd.f32 %v270, %v490
    %v507 = vadd.f32 %v271, %v491
    %v508 = vadd.f32 %v272, %v492
    %v509 = vadd.f32 %v273, %v493
    %v510 = vadd.f32 %v274, %v494
    %v511 = vadd.f32 %v275, %v495
    %v512 = vadd.f32 %v276, %v496
    %v513 = vadd.f32 %v277, %v497
    %v514 = vadd.f32 %v278, %v498
    %v515 = vadd.f32 %v279, %v499
    %s516 = scalar_lea.vmem [#allocation3], 32
    %v517 = vld [vmem:[%s516] sm:$0xff]
    %v518 = vld [vmem:[%s516 + $0x8] sm:$0xff]
    %v519 = vld [vmem:[%s516 + $0x10] sm:$0xff]
    %v520 = vld [vmem:[%s516 + $0x18] sm:$0xff]
    %s521 = scalar_lea.vmem %s4, 1
    %v522 = vld [vmem:[%s521] sm:$0x1]
    %v524 = vlaneseq
    %v525 = vshrl.u32 %v524, 7
    %v526 = vsub.s32 0, %v525
    %v527 = vrot.slane %v522, %v526
    %v530 = vsel %vm70, %v500, 0
    %v533 = vsel %vm70, %v501, 0
    %v536 = vsel %vm70, %v502, 0
    %v539 = vsel %vm70, %v503, 0
    %v542 = vsel %vm70, %v504, 0
    %v545 = vsel %vm70, %v505, 0
    %v548 = vsel %vm70, %v506, 0
    %v551 = vsel %vm70, %v507, 0
    %v554 = vsel %vm70, %v508, 0
    %v557 = vsel %vm70, %v509, 0
    %v560 = vsel %vm70, %v510, 0
    %v563 = vsel %vm70, %v511, 0
    %v566 = vsel %vm70, %v512, 0
    %v569 = vsel %vm70, %v513, 0
    %v572 = vsel %vm70, %v514, 0
    %v575 = vsel %vm70, %v515, 0
    %577 = vmatprep.subr.mxu0 0.0
    %578 = vmatpush1.msra.mxu0 %v517
    %579 = vmatprep.subr.mxu0 0.0
    %580 = vmatpush1.msra.mxu0 %v518
    %581 = vmatprep.subr.mxu0 0.0
    %582 = vmatpush1.msra.mxu0 %v519
    %583 = vmatprep.subr.mxu0 0.0
    %584 = vmatpush1.msra.mxu0 %v520
    %585 = vmatprep.subr.mxu0 0.0
    %586 = vmatpush1.msra.mxu0 0.0
    %587 = vmatprep.subr.mxu0 0.0
    %588 = vmatpush1.msra.mxu0 0.0
    %589 = vmatprep.subr.mxu0 0.0
    %590 = vmatpush1.msra.mxu0 0.0
    %591 = vmatprep.subr.mxu0 0.0
    %592 = vmatpush1.msra.mxu0 0.0
    %593 = vmatprep.subr.mxu0 0.0
    %594 = vmatpush1.msra.mxu0 0.0
    %595 = vmatprep.subr.mxu0 0.0
    %596 = vmatpush1.msra.mxu0 0.0
    %597 = vmatprep.subr.mxu0 0.0
    %598 = vmatpush1.msra.mxu0 0.0
    %599 = vmatprep.subr.mxu0 0.0
    %600 = vmatpush1.msra.mxu0 0.0
    %601 = vmatprep.subr.mxu0 0.0
    %602 = vmatpush1.msra.mxu0 0.0
    %603 = vmatprep.subr.mxu0 0.0
    %604 = vmatpush1.msra.mxu0 0.0
    %605 = vmatprep.subr.mxu0 0.0
    %606 = vmatpush1.msra.mxu0 0.0
    %607 = vmatprep.subr.mxu0 0.0
    %608 = vmatpush1.msra.mxu0 0.0
    %609 = vmatprep.subr.mxu0 0.0
    %610 = vmatpush1.msra.mxu0 0.0
    %611 = vmatprep.subr.mxu0 0.0
    %612 = vmatpush1.msra.mxu0 0.0
    %613 = vmatprep.subr.mxu0 0.0
    %614 = vmatpush1.msra.mxu0 0.0
    %615 = vmatprep.subr.mxu0 0.0
    %616 = vmatpush1.msra.mxu0 0.0
    %617 = vmatprep.subr.mxu0 0.0
    %618 = vmatpush1.msra.mxu0 0.0
    %619 = vmatprep.subr.mxu0 0.0
    %620 = vmatpush1.msra.mxu0 0.0
    %621 = vmatprep.subr.mxu0 0.0
    %622 = vmatpush1.msra.mxu0 0.0
    %623 = vmatprep.subr.mxu0 0.0
    %624 = vmatpush1.msra.mxu0 0.0
    %625 = vmatprep.subr.mxu0 0.0
    %626 = vmatpush1.msra.mxu0 0.0
    %627 = vmatprep.subr.mxu0 0.0
    %628 = vmatpush1.msra.mxu0 0.0
    %629 = vmatprep.subr.mxu0 0.0
    %630 = vmatpush1.msra.mxu0 0.0
    %631 = vmatprep.subr.mxu0 0.0
    %632 = vmatpush1.msra.mxu0 0.0
    %633 = vmatprep.subr.mxu0 0.0
    %634 = vmatpush1.msra.mxu0 0.0
    %635 = vmatprep.subr.mxu0 0.0
    %636 = vmatpush1.msra.mxu0 0.0
    %637 = vmatprep.subr.mxu0 0.0
    %638 = vmatpush1.msra.mxu0 0.0
    %639 = vmatprep.subr.mxu0 0.0
    %640 = vmatpush1.msra.mxu0 0.0
    %641 = vmatprep.mubr.f32.mxu0 0.0
    %642 = vmatmul.mubr.f32.gmra.mrb[0].mxu0 %v530
    %v643 = vpop.f32.mrb[0].mxu0
    %v644 = vadd.f32 %v527, %v643
    %v645 = vpop.f32.mrb[0].mxu0
    %646 = vmatprep.mubr.f32.mxu0 0.0
    %647 = vmatmul.mubr.f32.gmra.mrb[0].mxu0 %v533
    %v648 = vpop.f32.mrb[0].mxu0
    %v649 = vadd.f32 %v527, %v648
    %v650 = vpop.f32.mrb[0].mxu0
    %651 = vmatprep.mubr.f32.mxu0 0.0
    %652 = vmatmul.mubr.f32.gmra.mrb[0].mxu0 %v536
    %v653 = vpop.f32.mrb[0].mxu0
    %v654 = vadd.f32 %v527, %v653
    %v655 = vpop.f32.mrb[0].mxu0
    %656 = vmatprep.mubr.f32.mxu0 0.0
    %657 = vmatmul.mubr.f32.gmra.mrb[0].mxu0 %v539
    %v658 = vpop.f32.mrb[0].mxu0
    %v659 = vadd.f32 %v527, %v658
    %v660 = vpop.f32.mrb[0].mxu0
    %661 = vmatprep.mubr.f32.mxu0 0.0
    %662 = vmatmul.mubr.f32.gmra.mrb[0].mxu0 %v542
    %v663 = vpop.f32.mrb[0].mxu0
    %v664 = vadd.f32 %v527, %v663
    %v665 = vpop.f32.mrb[0].mxu0
    %666 = vmatprep.mubr.f32.mxu0 0.0
    %667 = vmatmul.mubr.f32.gmra.mrb[0].mxu0 %v545
    %v668 = vpop.f32.mrb[0].mxu0
    %v669 = vadd.f32 %v527, %v668
    %v670 = vpop.f32.mrb[0].mxu0
    %671 = vmatprep.mubr.f32.mxu0 0.0
    %672 = vmatmul.mubr.f32.gmra.mrb[0].mxu0 %v548
    %v673 = vpop.f32.mrb[0].mxu0
    %v674 = vadd.f32 %v527, %v673
    %v675 = vpop.f32.mrb[0].mxu0
    %676 = vmatprep.mubr.f32.mxu0 0.0
    %677 = vmatmul.mubr.f32.gmra.mrb[0].mxu0 %v551
    %v678 = vpop.f32.mrb[0].mxu0
    %v679 = vadd.f32 %v527, %v678
    %v680 = vpop.f32.mrb[0].mxu0
    %681 = vmatprep.mubr.f32.mxu0 0.0
    %682 = vmatmul.mubr.f32.gmra.mrb[0].mxu0 %v554
    %v683 = vpop.f32.mrb[0].mxu0
    %v684 = vadd.f32 %v527, %v683
    %v685 = vpop.f32.mrb[0].mxu0
    %686 = vmatprep.mubr.f32.mxu0 0.0
    %687 = vmatmul.mubr.f32.gmra.mrb[0].mxu0 %v557
    %v688 = vpop.f32.mrb[0].mxu0
    %v689 = vadd.f32 %v527, %v688
    %v690 = vpop.f32.mrb[0].mxu0
    %691 = vmatprep.mubr.f32.mxu0 0.0
    %692 = vmatmul.mubr.f32.gmra.mrb[0].mxu0 %v560
    %v693 = vpop.f32.mrb[0].mxu0
    %v694 = vadd.f32 %v527, %v693
    %v695 = vpop.f32.mrb[0].mxu0
    %696 = vmatprep.mubr.f32.mxu0 0.0
    %697 = vmatmul.mubr.f32.gmra.mrb[0].mxu0 %v563
    %v698 = vpop.f32.mrb[0].mxu0
    %v699 = vadd.f32 %v527, %v698
    %v700 = vpop.f32.mrb[0].mxu0
    %701 = vmatprep.mubr.f32.mxu0 0.0
    %702 = vmatmul.mubr.f32.gmra.mrb[0].mxu0 %v566
    %v703 = vpop.f32.mrb[0].mxu0
    %v704 = vadd.f32 %v527, %v703
    %v705 = vpop.f32.mrb[0].mxu0
    %706 = vmatprep.mubr.f32.mxu0 0.0
    %707 = vmatmul.mubr.f32.gmra.mrb[0].mxu0 %v569
    %v708 = vpop.f32.mrb[0].mxu0
    %v709 = vadd.f32 %v527, %v708
    %v710 = vpop.f32.mrb[0].mxu0
    %711 = vmatprep.mubr.f32.mxu0 0.0
    %712 = vmatmul.mubr.f32.gmra.mrb[0].mxu0 %v572
    %v713 = vpop.f32.mrb[0].mxu0
    %v714 = vadd.f32 %v527, %v713
    %v715 = vpop.f32.mrb[0].mxu0
    %716 = vmatprep.mubr.f32.mxu0 0.0
    %717 = vmatmul.mubr.f32.gmra.mrb[0].mxu0 %v575
    %v718 = vpop.f32.mrb[0].mxu0
    %v719 = vadd.f32 %v527, %v718
    %v720 = vpop.f32.mrb[0].mxu0
    %721 = vdwg.mxu0
    %v722 = vmax.f32 %v644, 0.0
    %v723 = vmax.f32 %v649, 0.0
    %v724 = vmax.f32 %v654, 0.0
    %v725 = vmax.f32 %v659, 0.0
    %v726 = vmax.f32 %v664, 0.0
    %v727 = vmax.f32 %v669, 0.0
    %v728 = vmax.f32 %v674, 0.0
    %v729 = vmax.f32 %v679, 0.0
    %v730 = vmax.f32 %v684, 0.0
    %v731 = vmax.f32 %v689, 0.0
    %v732 = vmax.f32 %v694, 0.0
    %v733 = vmax.f32 %v699, 0.0
    %v734 = vmax.f32 %v704, 0.0
    %v735 = vmax.f32 %v709, 0.0
    %v736 = vmax.f32 %v714, 0.0
    %v737 = vmax.f32 %v719, 0.0
    %v738 = vadd.f32 %v500, %v722
    %v739 = vadd.f32 %v501, %v723
    %v740 = vadd.f32 %v502, %v724
    %v741 = vadd.f32 %v503, %v725
    %v742 = vadd.f32 %v504, %v726
    %v743 = vadd.f32 %v505, %v727
    %v744 = vadd.f32 %v506, %v728
    %v745 = vadd.f32 %v507, %v729
    %v746 = vadd.f32 %v508, %v730
    %v747 = vadd.f32 %v509, %v731
    %v748 = vadd.f32 %v510, %v732
    %v749 = vadd.f32 %v511, %v733
    %v750 = vadd.f32 %v512, %v734
    %v751 = vadd.f32 %v513, %v735
    %v752 = vadd.f32 %v514, %v736
    %v753 = vadd.f32 %v515, %v737
    %s754 = scalar_lea.vmem [#allocation3], 64
    %v755 = vld [vmem:[%s754] sm:$0xff]
    %v756 = vld [vmem:[%s754 + $0x8] sm:$0xff]
    %v757 = vld [vmem:[%s754 + $0x10] sm:$0xff]
    %v758 = vld [vmem:[%s754 + $0x18] sm:$0xff]
    %s759 = scalar_lea.vmem %s4, 2
    %v760 = vld [vmem:[%s759] sm:$0x1]
    %v762 = vlaneseq
    %v763 = vshrl.u32 %v762, 7
    %v764 = vsub.s32 0, %v763
    %v765 = vrot.slane %v760, %v764
    %v768 = vsel %vm70, %v738, 0
    %v771 = vsel %vm70, %v739, 0
    %v774 = vsel %vm70, %v740, 0
    %v777 = vsel %vm70, %v741, 0
    %v780 = vsel %vm70, %v742, 0
    %v783 = vsel %vm70, %v743, 0
    %v786 = vsel %vm70, %v744, 0
    %v789 = vsel %vm70, %v745, 0
    %v792 = vsel %vm70, %v746, 0
    %v795 = vsel %vm70, %v747, 0
    %v798 = vsel %vm70, %v748, 0
    %v801 = vsel %vm70, %v749, 0
    %v804 = vsel %vm70, %v750, 0
    %v807 = vsel %vm70, %v751, 0
    %v810 = vsel %vm70, %v752, 0
    %v813 = vsel %vm70, %v753, 0
    %815 = vmatprep.subr.mxu0 0.0
    %816 = vmatpush1.msra.mxu0 %v755
    %817 = vmatprep.subr.mxu0 0.0
    %818 = vmatpush1.msra.mxu0 %v756
    %819 = vmatprep.subr.mxu0 0.0
    %820 = vmatpush1.msra.mxu0 %v757
    %821 = vmatprep.subr.mxu0 0.0
    %822 = vmatpush1.msra.mxu0 %v758
    %823 = vmatprep.subr.mxu0 0.0
    %824 = vmatpush1.msra.mxu0 0.0
    %825 = vmatprep.subr.mxu0 0.0
    %826 = vmatpush1.msra.mxu0 0.0
    %827 = vmatprep.subr.mxu0 0.0
    %828 = vmatpush1.msra.mxu0 0.0
    %829 = vmatprep.subr.mxu0 0.0
    %830 = vmatpush1.msra.mxu0 0.0
    %831 = vmatprep.subr.mxu0 0.0
    %832 = vmatpush1.msra.mxu0 0.0
    %833 = vmatprep.subr.mxu0 0.0
    %834 = vmatpush1.msra.mxu0 0.0
    %835 = vmatprep.subr.mxu0 0.0
    %836 = vmatpush1.msra.mxu0 0.0
    %837 = vmatprep.subr.mxu0 0.0
    %838 = vmatpush1.msra.mxu0 0.0
    %839 = vmatprep.subr.mxu0 0.0
    %840 = vmatpush1.msra.mxu0 0.0
    %841 = vmatprep.subr.mxu0 0.0
    %842 = vmatpush1.msra.mxu0 0.0
    %843 = vmatprep.subr.mxu0 0.0
    %844 = vmatpush1.msra.mxu0 0.0
    %845 = vmatprep.subr.mxu0 0.0
    %846 = vmatpush1.msra.mxu0 0.0
    %847 = vmatprep.subr.mxu0 0.0
    %848 = vmatpush1.msra.mxu0 0.0
    %849 = vmatprep.subr.mxu0 0.0
    %850 = vmatpush1.msra.mxu0 0.0
    %851 = vmatprep.subr.mxu0 0.0
    %852 = vmatpush1.msra.mxu0 0.0
    %853 = vmatprep.subr.mxu0 0.0
    %854 = vmatpush1.msra.mxu0 0.0
    %855 = vmatprep.subr.mxu0 0.0
    %856 = vmatpush1.msra.mxu0 0.0
    %857 = vmatprep.subr.mxu0 0.0
    %858 = vmatpush1.msra.mxu0 0.0
    %859 = vmatprep.subr.mxu0 0.0
    %860 = vmatpush1.msra.mxu0 0.0
    %861 = vmatprep.subr.mxu0 0.0
    %862 = vmatpush1.msra.mxu0 0.0
    %863 = vmatprep.subr.mxu0 0.0
    %864 = vmatpush1.msra.mxu0 0.0
    %865 = vmatprep.subr.mxu0 0.0
    %866 = vmatpush1.msra.mxu0 0.0
    %867 = vmatprep.subr.mxu0 0.0
    %868 = vmatpush1.msra.mxu0 0.0
    %869 = vmatprep.subr.mxu0 0.0
    %870 = vmatpush1.msra.mxu0 0.0
    %871 = vmatprep.subr.mxu0 0.0
    %872 = vmatpush1.msra.mxu0 0.0
    %873 = vmatprep.subr.mxu0 0.0
    %874 = vmatpush1.msra.mxu0 0.0
    %875 = vmatprep.subr.mxu0 0.0
    %876 = vmatpush1.msra.mxu0 0.0
    %877 = vmatprep.subr.mxu0 0.0
    %878 = vmatpush1.msra.mxu0 0.0
    %879 = vmatprep.mubr.f32.mxu0 0.0
    %880 = vmatmul.mubr.f32.gmra.mrb[0].mxu0 %v768
    %v881 = vpop.f32.mrb[0].mxu0
    %v882 = vadd.f32 %v765, %v881
    %v883 = vpop.f32.mrb[0].mxu0
    %884 = vmatprep.mubr.f32.mxu0 0.0
    %885 = vmatmul.mubr.f32.gmra.mrb[0].mxu0 %v771
    %v886 = vpop.f32.mrb[0].mxu0
    %v887 = vadd.f32 %v765, %v886
    %v888 = vpop.f32.mrb[0].mxu0
    %889 = vmatprep.mubr.f32.mxu0 0.0
    %890 = vmatmul.mubr.f32.gmra.mrb[0].mxu0 %v774
    %v891 = vpop.f32.mrb[0].mxu0
    %v892 = vadd.f32 %v765, %v891
    %v893 = vpop.f32.mrb[0].mxu0
    %894 = vmatprep.mubr.f32.mxu0 0.0
    %895 = vmatmul.mubr.f32.gmra.mrb[0].mxu0 %v777
    %v896 = vpop.f32.mrb[0].mxu0
    %v897 = vadd.f32 %v765, %v896
    %v898 = vpop.f32.mrb[0].mxu0
    %899 = vmatprep.mubr.f32.mxu0 0.0
    %900 = vmatmul.mubr.f32.gmra.mrb[0].mxu0 %v780
    %v901 = vpop.f32.mrb[0].mxu0
    %v902 = vadd.f32 %v765, %v901
    %v903 = vpop.f32.mrb[0].mxu0
    %904 = vmatprep.mubr.f32.mxu0 0.0
    %905 = vmatmul.mubr.f32.gmra.mrb[0].mxu0 %v783
    %v906 = vpop.f32.mrb[0].mxu0
    %v907 = vadd.f32 %v765, %v906
    %v908 = vpop.f32.mrb[0].mxu0
    %909 = vmatprep.mubr.f32.mxu0 0.0
    %910 = vmatmul.mubr.f32.gmra.mrb[0].mxu0 %v786
    %v911 = vpop.f32.mrb[0].mxu0
    %v912 = vadd.f32 %v765, %v911
    %v913 = vpop.f32.mrb[0].mxu0
    %914 = vmatprep.mubr.f32.mxu0 0.0
    %915 = vmatmul.mubr.f32.gmra.mrb[0].mxu0 %v789
    %v916 = vpop.f32.mrb[0].mxu0
    %v917 = vadd.f32 %v765, %v916
    %v918 = vpop.f32.mrb[0].mxu0
    %919 = vmatprep.mubr.f32.mxu0 0.0
    %920 = vmatmul.mubr.f32.gmra.mrb[0].mxu0 %v792
    %v921 = vpop.f32.mrb[0].mxu0
    %v922 = vadd.f32 %v765, %v921
    %v923 = vpop.f32.mrb[0].mxu0
    %924 = vmatprep.mubr.f32.mxu0 0.0
    %925 = vmatmul.mubr.f32.gmra.mrb[0].mxu0 %v795
    %v926 = vpop.f32.mrb[0].mxu0
    %v927 = vadd.f32 %v765, %v926
    %v928 = vpop.f32.mrb[0].mxu0
    %929 = vmatprep.mubr.f32.mxu0 0.0
    %930 = vmatmul.mubr.f32.gmra.mrb[0].mxu0 %v798
    %v931 = vpop.f32.mrb[0].mxu0
    %v932 = vadd.f32 %v765, %v931
    %v933 = vpop.f32.mrb[0].mxu0
    %934 = vmatprep.mubr.f32.mxu0 0.0
    %935 = vmatmul.mubr.f32.gmra.mrb[0].mxu0 %v801
    %v936 = vpop.f32.mrb[0].mxu0
    %v937 = vadd.f32 %v765, %v936
    %v938 = vpop.f32.mrb[0].mxu0
    %939 = vmatprep.mubr.f32.mxu0 0.0
    %940 = vmatmul.mubr.f32.gmra.mrb[0].mxu0 %v804
    %v941 = vpop.f32.mrb[0].mxu0
    %v942 = vadd.f32 %v765, %v941
    %v943 = vpop.f32.mrb[0].mxu0
    %944 = vmatprep.mubr.f32.mxu0 0.0
    %945 = vmatmul.mubr.f32.gmra.mrb[0].mxu0 %v807
    %v946 = vpop.f32.mrb[0].mxu0
    %v947 = vadd.f32 %v765, %v946
    %v948 = vpop.f32.mrb[0].mxu0
    %949 = vmatprep.mubr.f32.mxu0 0.0
    %950 = vmatmul.mubr.f32.gmra.mrb[0].mxu0 %v810
    %v951 = vpop.f32.mrb[0].mxu0
    %v952 = vadd.f32 %v765, %v951
    %v953 = vpop.f32.mrb[0].mxu0
    %954 = vmatprep.mubr.f32.mxu0 0.0
    %955 = vmatmul.mubr.f32.gmra.mrb[0].mxu0 %v813
    %v956 = vpop.f32.mrb[0].mxu0
    %v957 = vadd.f32 %v765, %v956
    %v958 = vpop.f32.mrb[0].mxu0
    %959 = vdwg.mxu0
    %v960 = vmax.f32 %v882, 0.0
    %v961 = vmax.f32 %v887, 0.0
    %v962 = vmax.f32 %v892, 0.0
    %v963 = vmax.f32 %v897, 0.0
    %v964 = vmax.f32 %v902, 0.0
    %v965 = vmax.f32 %v907, 0.0
    %v966 = vmax.f32 %v912, 0.0
    %v967 = vmax.f32 %v917, 0.0
    %v968 = vmax.f32 %v922, 0.0
    %v969 = vmax.f32 %v927, 0.0
    %v970 = vmax.f32 %v932, 0.0
    %v971 = vmax.f32 %v937, 0.0
    %v972 = vmax.f32 %v942, 0.0
    %v973 = vmax.f32 %v947, 0.0
    %v974 = vmax.f32 %v952, 0.0
    %v975 = vmax.f32 %v957, 0.0
    %v976 = vadd.f32 %v738, %v960
    %v977 = vadd.f32 %v739, %v961
    %v978 = vadd.f32 %v740, %v962
    %v979 = vadd.f32 %v741, %v963
    %v980 = vadd.f32 %v742, %v964
    %v981 = vadd.f32 %v743, %v965
    %v982 = vadd.f32 %v744, %v966
    %v983 = vadd.f32 %v745, %v967
    %v984 = vadd.f32 %v746, %v968
    %v985 = vadd.f32 %v747, %v969
    %v986 = vadd.f32 %v748, %v970
    %v987 = vadd.f32 %v749, %v971
    %v988 = vadd.f32 %v750, %v972
    %v989 = vadd.f32 %v751, %v973
    %v990 = vadd.f32 %v752, %v974
    %v991 = vadd.f32 %v753, %v975
    %s992 = scalar_lea.vmem [#allocation3], 96
    %v993 = vld [vmem:[%s992] sm:$0xff]
    %v994 = vld [vmem:[%s992 + $0x8] sm:$0xff]
    %v995 = vld [vmem:[%s992 + $0x10] sm:$0xff]
    %v996 = vld [vmem:[%s992 + $0x18] sm:$0xff]
    %s997 = scalar_lea.vmem %s4, 3
    %v998 = vld [vmem:[%s997] sm:$0x1]
    %v1000 = vlaneseq
    %v1001 = vshrl.u32 %v1000, 7
    %v1002 = vsub.s32 0, %v1001
    %v1003 = vrot.slane %v998, %v1002
    %v1006 = vsel %vm70, %v976, 0
    %v1009 = vsel %vm70, %v977, 0
    %v1012 = vsel %vm70, %v978, 0
    %v1015 = vsel %vm70, %v979, 0
    %v1018 = vsel %vm70, %v980, 0
    %v1021 = vsel %vm70, %v981, 0
    %v1024 = vsel %vm70, %v982, 0
    %v1027 = vsel %vm70, %v983, 0
    %v1030 = vsel %vm70, %v984, 0
    %v1033 = vsel %vm70, %v985, 0
    %v1036 = vsel %vm70, %v986, 0
    %v1039 = vsel %vm70, %v987, 0
    %v1042 = vsel %vm70, %v988, 0
    %v1045 = vsel %vm70, %v989, 0
    %v1048 = vsel %vm70, %v990, 0
    %v1051 = vsel %vm70, %v991, 0
    %1053 = vmatprep.subr.mxu0 0.0
    %1054 = vmatpush1.msra.mxu0 %v993
    %1055 = vmatprep.subr.mxu0 0.0
    %1056 = vmatpush1.msra.mxu0 %v994
    %1057 = vmatprep.subr.mxu0 0.0
    %1058 = vmatpush1.msra.mxu0 %v995
    %1059 = vmatprep.subr.mxu0 0.0
    %1060 = vmatpush1.msra.mxu0 %v996
    %1061 = vmatprep.subr.mxu0 0.0
    %1062 = vmatpush1.msra.mxu0 0.0
    %1063 = vmatprep.subr.mxu0 0.0
    %1064 = vmatpush1.msra.mxu0 0.0
    %1065 = vmatprep.subr.mxu0 0.0
    %1066 = vmatpush1.msra.mxu0 0.0
    %1067 = vmatprep.subr.mxu0 0.0
    %1068 = vmatpush1.msra.mxu0 0.0
    %1069 = vmatprep.subr.mxu0 0.0
    %1070 = vmatpush1.msra.mxu0 0.0
    %1071 = vmatprep.subr.mxu0 0.0
    %1072 = vmatpush1.msra.mxu0 0.0
    %1073 = vmatprep.subr.mxu0 0.0
    %1074 = vmatpush1.msra.mxu0 0.0
    %1075 = vmatprep.subr.mxu0 0.0
    %1076 = vmatpush1.msra.mxu0 0.0
    %1077 = vmatprep.subr.mxu0 0.0
    %1078 = vmatpush1.msra.mxu0 0.0
    %1079 = vmatprep.subr.mxu0 0.0
    %1080 = vmatpush1.msra.mxu0 0.0
    %1081 = vmatprep.subr.mxu0 0.0
    %1082 = vmatpush1.msra.mxu0 0.0
    %1083 = vmatprep.subr.mxu0 0.0
    %1084 = vmatpush1.msra.mxu0 0.0
    %1085 = vmatprep.subr.mxu0 0.0
    %1086 = vmatpush1.msra.mxu0 0.0
    %1087 = vmatprep.subr.mxu0 0.0
    %1088 = vmatpush1.msra.mxu0 0.0
    %1089 = vmatprep.subr.mxu0 0.0
    %1090 = vmatpush1.msra.mxu0 0.0
    %1091 = vmatprep.subr.mxu0 0.0
    %1092 = vmatpush1.msra.mxu0 0.0
    %1093 = vmatprep.subr.mxu0 0.0
    %1094 = vmatpush1.msra.mxu0 0.0
    %1095 = vmatprep.subr.mxu0 0.0
    %1096 = vmatpush1.msra.mxu0 0.0
    %1097 = vmatprep.subr.mxu0 0.0
    %1098 = vmatpush1.msra.mxu0 0.0
    %1099 = vmatprep.subr.mxu0 0.0
    %1100 = vmatpush1.msra.mxu0 0.0
    %1101 = vmatprep.subr.mxu0 0.0
    %1102 = vmatpush1.msra.mxu0 0.0
    %1103 = vmatprep.subr.mxu0 0.0
    %1104 = vmatpush1.msra.mxu0 0.0
    %1105 = vmatprep.subr.mxu0 0.0
    %1106 = vmatpush1.msra.mxu0 0.0
    %1107 = vmatprep.subr.mxu0 0.0
    %1108 = vmatpush1.msra.mxu0 0.0
    %1109 = vmatprep.subr.mxu0 0.0
    %1110 = vmatpush1.msra.mxu0 0.0
    %1111 = vmatprep.subr.mxu0 0.0
    %1112 = vmatpush1.msra.mxu0 0.0
    %1113 = vmatprep.subr.mxu0 0.0
    %1114 = vmatpush1.msra.mxu0 0.0
    %1115 = vmatprep.subr.mxu0 0.0
    %1116 = vmatpush1.msra.mxu0 0.0
    %1117 = vmatprep.mubr.f32.mxu0 0.0
    %1118 = vmatmul.mubr.f32.gmra.mrb[0].mxu0 %v1006
    %v1119 = vpop.f32.mrb[0].mxu0
    %v1120 = vadd.f32 %v1003, %v1119
    %v1121 = vpop.f32.mrb[0].mxu0
    %1122 = vmatprep.mubr.f32.mxu0 0.0
    %1123 = vmatmul.mubr.f32.gmra.mrb[0].mxu0 %v1009
    %v1124 = vpop.f32.mrb[0].mxu0
    %v1125 = vadd.f32 %v1003, %v1124
    %v1126 = vpop.f32.mrb[0].mxu0
    %1127 = vmatprep.mubr.f32.mxu0 0.0
    %1128 = vmatmul.mubr.f32.gmra.mrb[0].mxu0 %v1012
    %v1129 = vpop.f32.mrb[0].mxu0
    %v1130 = vadd.f32 %v1003, %v1129
    %v1131 = vpop.f32.mrb[0].mxu0
    %1132 = vmatprep.mubr.f32.mxu0 0.0
    %1133 = vmatmul.mubr.f32.gmra.mrb[0].mxu0 %v1015
    %v1134 = vpop.f32.mrb[0].mxu0
    %v1135 = vadd.f32 %v1003, %v1134
    %v1136 = vpop.f32.mrb[0].mxu0
    %1137 = vmatprep.mubr.f32.mxu0 0.0
    %1138 = vmatmul.mubr.f32.gmra.mrb[0].mxu0 %v1018
    %v1139 = vpop.f32.mrb[0].mxu0
    %v1140 = vadd.f32 %v1003, %v1139
    %v1141 = vpop.f32.mrb[0].mxu0
    %1142 = vmatprep.mubr.f32.mxu0 0.0
    %1143 = vmatmul.mubr.f32.gmra.mrb[0].mxu0 %v1021
    %v1144 = vpop.f32.mrb[0].mxu0
    %v1145 = vadd.f32 %v1003, %v1144
    %v1146 = vpop.f32.mrb[0].mxu0
    %1147 = vmatprep.mubr.f32.mxu0 0.0
    %1148 = vmatmul.mubr.f32.gmra.mrb[0].mxu0 %v1024
    %v1149 = vpop.f32.mrb[0].mxu0
    %v1150 = vadd.f32 %v1003, %v1149
    %v1151 = vpop.f32.mrb[0].mxu0
    %1152 = vmatprep.mubr.f32.mxu0 0.0
    %1153 = vmatmul.mubr.f32.gmra.mrb[0].mxu0 %v1027
    %v1154 = vpop.f32.mrb[0].mxu0
    %v1155 = vadd.f32 %v1003, %v1154
    %v1156 = vpop.f32.mrb[0].mxu0
    %1157 = vmatprep.mubr.f32.mxu0 0.0
    %1158 = vmatmul.mubr.f32.gmra.mrb[0].mxu0 %v1030
    %v1159 = vpop.f32.mrb[0].mxu0
    %v1160 = vadd.f32 %v1003, %v1159
    %v1161 = vpop.f32.mrb[0].mxu0
    %1162 = vmatprep.mubr.f32.mxu0 0.0
    %1163 = vmatmul.mubr.f32.gmra.mrb[0].mxu0 %v1033
    %v1164 = vpop.f32.mrb[0].mxu0
    %v1165 = vadd.f32 %v1003, %v1164
    %v1166 = vpop.f32.mrb[0].mxu0
    %1167 = vmatprep.mubr.f32.mxu0 0.0
    %1168 = vmatmul.mubr.f32.gmra.mrb[0].mxu0 %v1036
    %v1169 = vpop.f32.mrb[0].mxu0
    %v1170 = vadd.f32 %v1003, %v1169
    %v1171 = vpop.f32.mrb[0].mxu0
    %1172 = vmatprep.mubr.f32.mxu0 0.0
    %1173 = vmatmul.mubr.f32.gmra.mrb[0].mxu0 %v1039
    %v1174 = vpop.f32.mrb[0].mxu0
    %v1175 = vadd.f32 %v1003, %v1174
    %v1176 = vpop.f32.mrb[0].mxu0
    %1177 = vmatprep.mubr.f32.mxu0 0.0
    %1178 = vmatmul.mubr.f32.gmra.mrb[0].mxu0 %v1042
    %v1179 = vpop.f32.mrb[0].mxu0
    %v1180 = vadd.f32 %v1003, %v1179
    %v1181 = vpop.f32.mrb[0].mxu0
    %1182 = vmatprep.mubr.f32.mxu0 0.0
    %1183 = vmatmul.mubr.f32.gmra.mrb[0].mxu0 %v1045
    %v1184 = vpop.f32.mrb[0].mxu0
    %v1185 = vadd.f32 %v1003, %v1184
    %v1186 = vpop.f32.mrb[0].mxu0
    %1187 = vmatprep.mubr.f32.mxu0 0.0
    %1188 = vmatmul.mubr.f32.gmra.mrb[0].mxu0 %v1048
    %v1189 = vpop.f32.mrb[0].mxu0
    %v1190 = vadd.f32 %v1003, %v1189
    %v1191 = vpop.f32.mrb[0].mxu0
    %1192 = vmatprep.mubr.f32.mxu0 0.0
    %1193 = vmatmul.mubr.f32.gmra.mrb[0].mxu0 %v1051
    %v1194 = vpop.f32.mrb[0].mxu0
    %v1195 = vadd.f32 %v1003, %v1194
    %v1196 = vpop.f32.mrb[0].mxu0
    %1197 = vdwg.mxu0
    %v1198 = vmax.f32 %v1120, 0.0
    %v1199 = vmax.f32 %v1125, 0.0
    %v1200 = vmax.f32 %v1130, 0.0
    %v1201 = vmax.f32 %v1135, 0.0
    %v1202 = vmax.f32 %v1140, 0.0
    %v1203 = vmax.f32 %v1145, 0.0
    %v1204 = vmax.f32 %v1150, 0.0
    %v1205 = vmax.f32 %v1155, 0.0
    %v1206 = vmax.f32 %v1160, 0.0
    %v1207 = vmax.f32 %v1165, 0.0
    %v1208 = vmax.f32 %v1170, 0.0
    %v1209 = vmax.f32 %v1175, 0.0
    %v1210 = vmax.f32 %v1180, 0.0
    %v1211 = vmax.f32 %v1185, 0.0
    %v1212 = vmax.f32 %v1190, 0.0
    %v1213 = vmax.f32 %v1195, 0.0
    %v1214 = vadd.f32 %v976, %v1198
    %v1215 = vadd.f32 %v977, %v1199
    %v1216 = vadd.f32 %v978, %v1200
    %v1217 = vadd.f32 %v979, %v1201
    %v1218 = vadd.f32 %v980, %v1202
    %v1219 = vadd.f32 %v981, %v1203
    %v1220 = vadd.f32 %v982, %v1204
    %v1221 = vadd.f32 %v983, %v1205
    %v1222 = vadd.f32 %v984, %v1206
    %v1223 = vadd.f32 %v985, %v1207
    %v1224 = vadd.f32 %v986, %v1208
    %v1225 = vadd.f32 %v987, %v1209
    %v1226 = vadd.f32 %v988, %v1210
    %v1227 = vadd.f32 %v989, %v1211
    %v1228 = vadd.f32 %v990, %v1212
    %v1229 = vadd.f32 %v991, %v1213
    %s1230 = scalar_lea.vmem [#allocation3], 128
    %v1231 = vld [vmem:[%s1230] sm:$0xff]
    %v1232 = vld [vmem:[%s1230 + $0x8] sm:$0xff]
    %v1233 = vld [vmem:[%s1230 + $0x10] sm:$0xff]
    %v1234 = vld [vmem:[%s1230 + $0x18] sm:$0xff]
    %s1235 = scalar_lea.vmem %s4, 4
    %v1236 = vld [vmem:[%s1235] sm:$0x1]
    %v1238 = vlaneseq
    %v1239 = vshrl.u32 %v1238, 7
    %v1240 = vsub.s32 0, %v1239
    %v1241 = vrot.slane %v1236, %v1240
    %v1244 = vsel %vm70, %v1214, 0
    %v1247 = vsel %vm70, %v1215, 0
    %v1250 = vsel %vm70, %v1216, 0
    %v1253 = vsel %vm70, %v1217, 0
    %v1256 = vsel %vm70, %v1218, 0
    %v1259 = vsel %vm70, %v1219, 0
    %v1262 = vsel %vm70, %v1220, 0
    %v1265 = vsel %vm70, %v1221, 0
    %v1268 = vsel %vm70, %v1222, 0
    %v1271 = vsel %vm70, %v1223, 0
    %v1274 = vsel %vm70, %v1224, 0
    %v1277 = vsel %vm70, %v1225, 0
    %v1280 = vsel %vm70, %v1226, 0
    %v1283 = vsel %vm70, %v1227, 0
    %v1286 = vsel %vm70, %v1228, 0
    %v1289 = vsel %vm70, %v1229, 0
    %1291 = vmatprep.subr.mxu0 0.0
    %1292 = vmatpush1.msra.mxu0 %v1231
    %1293 = vmatprep.subr.mxu0 0.0
    %1294 = vmatpush1.msra.mxu0 %v1232
    %1295 = vmatprep.subr.mxu0 0.0
    %1296 = vmatpush1.msra.mxu0 %v1233
    %1297 = vmatprep.subr.mxu0 0.0
    %1298 = vmatpush1.msra.mxu0 %v1234
    %1299 = vmatprep.subr.mxu0 0.0
    %1300 = vmatpush1.msra.mxu0 0.0
    %1301 = vmatprep.subr.mxu0 0.0
    %1302 = vmatpush1.msra.mxu0 0.0
    %1303 = vmatprep.subr.mxu0 0.0
    %1304 = vmatpush1.msra.mxu0 0.0
    %1305 = vmatprep.subr.mxu0 0.0
    %1306 = vmatpush1.msra.mxu0 0.0
    %1307 = vmatprep.subr.mxu0 0.0
    %1308 = vmatpush1.msra.mxu0 0.0
    %1309 = vmatprep.subr.mxu0 0.0
    %1310 = vmatpush1.msra.mxu0 0.0
    %1311 = vmatprep.subr.mxu0 0.0
    %1312 = vmatpush1.msra.mxu0 0.0
    %1313 = vmatprep.subr.mxu0 0.0
    %1314 = vmatpush1.msra.mxu0 0.0
    %1315 = vmatprep.subr.mxu0 0.0
    %1316 = vmatpush1.msra.mxu0 0.0
    %1317 = vmatprep.subr.mxu0 0.0
    %1318 = vmatpush1.msra.mxu0 0.0
    %1319 = vmatprep.subr.mxu0 0.0
    %1320 = vmatpush1.msra.mxu0 0.0
    %1321 = vmatprep.subr.mxu0 0.0
    %1322 = vmatpush1.msra.mxu0 0.0
    %1323 = vmatprep.subr.mxu0 0.0
    %1324 = vmatpush1.msra.mxu0 0.0
    %1325 = vmatprep.subr.mxu0 0.0
    %1326 = vmatpush1.msra.mxu0 0.0
    %1327 = vmatprep.subr.mxu0 0.0
    %1328 = vmatpush1.msra.mxu0 0.0
    %1329 = vmatprep.subr.mxu0 0.0
    %1330 = vmatpush1.msra.mxu0 0.0
    %1331 = vmatprep.subr.mxu0 0.0
    %1332 = vmatpush1.msra.mxu0 0.0
    %1333 = vmatprep.subr.mxu0 0.0
    %1334 = vmatpush1.msra.mxu0 0.0
    %1335 = vmatprep.subr.mxu0 0.0
    %1336 = vmatpush1.msra.mxu0 0.0
    %1337 = vmatprep.subr.mxu0 0.0
    %1338 = vmatpush1.msra.mxu0 0.0
    %1339 = vmatprep.subr.mxu0 0.0
    %1340 = vmatpush1.msra.mxu0 0.0
    %1341 = vmatprep.subr.mxu0 0.0
    %1342 = vmatpush1.msra.mxu0 0.0
    %1343 = vmatprep.subr.mxu0 0.0
    %1344 = vmatpush1.msra.mxu0 0.0
    %1345 = vmatprep.subr.mxu0 0.0
    %1346 = vmatpush1.msra.mxu0 0.0
    %1347 = vmatprep.subr.mxu0 0.0
    %1348 = vmatpush1.msra.mxu0 0.0
    %1349 = vmatprep.subr.mxu0 0.0
    %1350 = vmatpush1.msra.mxu0 0.0
    %1351 = vmatprep.subr.mxu0 0.0
    %1352 = vmatpush1.msra.mxu0 0.0
    %1353 = vmatprep.subr.mxu0 0.0
    %1354 = vmatpush1.msra.mxu0 0.0
    %1355 = vmatprep.mubr.f32.mxu0 0.0
    %1356 = vmatmul.mubr.f32.gmra.mrb[0].mxu0 %v1244
    %v1357 = vpop.f32.mrb[0].mxu0
    %v1358 = vadd.f32 %v1241, %v1357
    %v1359 = vpop.f32.mrb[0].mxu0
    %1360 = vmatprep.mubr.f32.mxu0 0.0
    %1361 = vmatmul.mubr.f32.gmra.mrb[0].mxu0 %v1247
    %v1362 = vpop.f32.mrb[0].mxu0
    %v1363 = vadd.f32 %v1241, %v1362
    %v1364 = vpop.f32.mrb[0].mxu0
    %1365 = vmatprep.mubr.f32.mxu0 0.0
    %1366 = vmatmul.mubr.f32.gmra.mrb[0].mxu0 %v1250
    %v1367 = vpop.f32.mrb[0].mxu0
    %v1368 = vadd.f32 %v1241, %v1367
    %v1369 = vpop.f32.mrb[0].mxu0
    %1370 = vmatprep.mubr.f32.mxu0 0.0
    %1371 = vmatmul.mubr.f32.gmra.mrb[0].mxu0 %v1253
    %v1372 = vpop.f32.mrb[0].mxu0
    %v1373 = vadd.f32 %v1241, %v1372
    %v1374 = vpop.f32.mrb[0].mxu0
    %1375 = vmatprep.mubr.f32.mxu0 0.0
    %1376 = vmatmul.mubr.f32.gmra.mrb[0].mxu0 %v1256
    %v1377 = vpop.f32.mrb[0].mxu0
    %v1378 = vadd.f32 %v1241, %v1377
    %v1379 = vpop.f32.mrb[0].mxu0
    %1380 = vmatprep.mubr.f32.mxu0 0.0
    %1381 = vmatmul.mubr.f32.gmra.mrb[0].mxu0 %v1259
    %v1382 = vpop.f32.mrb[0].mxu0
    %v1383 = vadd.f32 %v1241, %v1382
    %v1384 = vpop.f32.mrb[0].mxu0
    %1385 = vmatprep.mubr.f32.mxu0 0.0
    %1386 = vmatmul.mubr.f32.gmra.mrb[0].mxu0 %v1262
    %v1387 = vpop.f32.mrb[0].mxu0
    %v1388 = vadd.f32 %v1241, %v1387
    %v1389 = vpop.f32.mrb[0].mxu0
    %1390 = vmatprep.mubr.f32.mxu0 0.0
    %1391 = vmatmul.mubr.f32.gmra.mrb[0].mxu0 %v1265
    %v1392 = vpop.f32.mrb[0].mxu0
    %v1393 = vadd.f32 %v1241, %v1392
    %v1394 = vpop.f32.mrb[0].mxu0
    %1395 = vmatprep.mubr.f32.mxu0 0.0
    %1396 = vmatmul.mubr.f32.gmra.mrb[0].mxu0 %v1268
    %v1397 = vpop.f32.mrb[0].mxu0
    %v1398 = vadd.f32 %v1241, %v1397
    %v1399 = vpop.f32.mrb[0].mxu0
    %1400 = vmatprep.mubr.f32.mxu0 0.0
    %1401 = vmatmul.mubr.f32.gmra.mrb[0].mxu0 %v1271
    %v1402 = vpop.f32.mrb[0].mxu0
    %v1403 = vadd.f32 %v1241, %v1402
    %v1404 = vpop.f32.mrb[0].mxu0
    %1405 = vmatprep.mubr.f32.mxu0 0.0
    %1406 = vmatmul.mubr.f32.gmra.mrb[0].mxu0 %v1274
    %v1407 = vpop.f32.mrb[0].mxu0
    %v1408 = vadd.f32 %v1241, %v1407
    %v1409 = vpop.f32.mrb[0].mxu0
    %1410 = vmatprep.mubr.f32.mxu0 0.0
    %1411 = vmatmul.mubr.f32.gmra.mrb[0].mxu0 %v1277
    %v1412 = vpop.f32.mrb[0].mxu0
    %v1413 = vadd.f32 %v1241, %v1412
    %v1414 = vpop.f32.mrb[0].mxu0
    %1415 = vmatprep.mubr.f32.mxu0 0.0
    %1416 = vmatmul.mubr.f32.gmra.mrb[0].mxu0 %v1280
    %v1417 = vpop.f32.mrb[0].mxu0
    %v1418 = vadd.f32 %v1241, %v1417
    %v1419 = vpop.f32.mrb[0].mxu0
    %1420 = vmatprep.mubr.f32.mxu0 0.0
    %1421 = vmatmul.mubr.f32.gmra.mrb[0].mxu0 %v1283
    %v1422 = vpop.f32.mrb[0].mxu0
    %v1423 = vadd.f32 %v1241, %v1422
    %v1424 = vpop.f32.mrb[0].mxu0
    %1425 = vmatprep.mubr.f32.mxu0 0.0
    %1426 = vmatmul.mubr.f32.gmra.mrb[0].mxu0 %v1286
    %v1427 = vpop.f32.mrb[0].mxu0
    %v1428 = vadd.f32 %v1241, %v1427
    %v1429 = vpop.f32.mrb[0].mxu0
    %1430 = vmatprep.mubr.f32.mxu0 0.0
    %1431 = vmatmul.mubr.f32.gmra.mrb[0].mxu0 %v1289
    %v1432 = vpop.f32.mrb[0].mxu0
    %v1433 = vadd.f32 %v1241, %v1432
    %v1434 = vpop.f32.mrb[0].mxu0
    %1435 = vdwg.mxu0
    %v1436 = vmax.f32 %v1358, 0.0
    %v1437 = vmax.f32 %v1363, 0.0
    %v1438 = vmax.f32 %v1368, 0.0
    %v1439 = vmax.f32 %v1373, 0.0
    %v1440 = vmax.f32 %v1378, 0.0
    %v1441 = vmax.f32 %v1383, 0.0
    %v1442 = vmax.f32 %v1388, 0.0
    %v1443 = vmax.f32 %v1393, 0.0
    %v1444 = vmax.f32 %v1398, 0.0
    %v1445 = vmax.f32 %v1403, 0.0
    %v1446 = vmax.f32 %v1408, 0.0
    %v1447 = vmax.f32 %v1413, 0.0
    %v1448 = vmax.f32 %v1418, 0.0
    %v1449 = vmax.f32 %v1423, 0.0
    %v1450 = vmax.f32 %v1428, 0.0
    %v1451 = vmax.f32 %v1433, 0.0
    %v1452 = vadd.f32 %v1214, %v1436
    %v1453 = vadd.f32 %v1215, %v1437
    %v1454 = vadd.f32 %v1216, %v1438
    %v1455 = vadd.f32 %v1217, %v1439
    %v1456 = vadd.f32 %v1218, %v1440
    %v1457 = vadd.f32 %v1219, %v1441
    %v1458 = vadd.f32 %v1220, %v1442
    %v1459 = vadd.f32 %v1221, %v1443
    %v1460 = vadd.f32 %v1222, %v1444
    %v1461 = vadd.f32 %v1223, %v1445
    %v1462 = vadd.f32 %v1224, %v1446
    %v1463 = vadd.f32 %v1225, %v1447
    %v1464 = vadd.f32 %v1226, %v1448
    %v1465 = vadd.f32 %v1227, %v1449
    %v1466 = vadd.f32 %v1228, %v1450
    %v1467 = vadd.f32 %v1229, %v1451
    %s1468 = scalar_lea.vmem [#allocation3], 160
    %v1469 = vld [vmem:[%s1468] sm:$0xff]
    %v1470 = vld [vmem:[%s1468 + $0x8] sm:$0xff]
    %v1471 = vld [vmem:[%s1468 + $0x10] sm:$0xff]
    %v1472 = vld [vmem:[%s1468 + $0x18] sm:$0xff]
    %s1473 = scalar_lea.vmem %s4, 5
    %v1474 = vld [vmem:[%s1473] sm:$0x1]
    %v1476 = vlaneseq
    %v1477 = vshrl.u32 %v1476, 7
    %v1478 = vsub.s32 0, %v1477
    %v1479 = vrot.slane %v1474, %v1478
    %v1482 = vsel %vm70, %v1452, 0
    %v1485 = vsel %vm70, %v1453, 0
    %v1488 = vsel %vm70, %v1454, 0
    %v1491 = vsel %vm70, %v1455, 0
    %v1494 = vsel %vm70, %v1456, 0
    %v1497 = vsel %vm70, %v1457, 0
    %v1500 = vsel %vm70, %v1458, 0
    %v1503 = vsel %vm70, %v1459, 0
    %v1506 = vsel %vm70, %v1460, 0
    %v1509 = vsel %vm70, %v1461, 0
    %v1512 = vsel %vm70, %v1462, 0
    %v1515 = vsel %vm70, %v1463, 0
    %v1518 = vsel %vm70, %v1464, 0
    %v1521 = vsel %vm70, %v1465, 0
    %v1524 = vsel %vm70, %v1466, 0
    %v1527 = vsel %vm70, %v1467, 0
    %1529 = vmatprep.subr.mxu0 0.0
    %1530 = vmatpush1.msra.mxu0 %v1469
    %1531 = vmatprep.subr.mxu0 0.0
    %1532 = vmatpush1.msra.mxu0 %v1470
    %1533 = vmatprep.subr.mxu0 0.0
    %1534 = vmatpush1.msra.mxu0 %v1471
    %1535 = vmatprep.subr.mxu0 0.0
    %1536 = vmatpush1.msra.mxu0 %v1472
    %1537 = vmatprep.subr.mxu0 0.0
    %1538 = vmatpush1.msra.mxu0 0.0
    %1539 = vmatprep.subr.mxu0 0.0
    %1540 = vmatpush1.msra.mxu0 0.0
    %1541 = vmatprep.subr.mxu0 0.0
    %1542 = vmatpush1.msra.mxu0 0.0
    %1543 = vmatprep.subr.mxu0 0.0
    %1544 = vmatpush1.msra.mxu0 0.0
    %1545 = vmatprep.subr.mxu0 0.0
    %1546 = vmatpush1.msra.mxu0 0.0
    %1547 = vmatprep.subr.mxu0 0.0
    %1548 = vmatpush1.msra.mxu0 0.0
    %1549 = vmatprep.subr.mxu0 0.0
    %1550 = vmatpush1.msra.mxu0 0.0
    %1551 = vmatprep.subr.mxu0 0.0
    %1552 = vmatpush1.msra.mxu0 0.0
    %1553 = vmatprep.subr.mxu0 0.0
    %1554 = vmatpush1.msra.mxu0 0.0
    %1555 = vmatprep.subr.mxu0 0.0
    %1556 = vmatpush1.msra.mxu0 0.0
    %1557 = vmatprep.subr.mxu0 0.0
    %1558 = vmatpush1.msra.mxu0 0.0
    %1559 = vmatprep.subr.mxu0 0.0
    %1560 = vmatpush1.msra.mxu0 0.0
    %1561 = vmatprep.subr.mxu0 0.0
    %1562 = vmatpush1.msra.mxu0 0.0
    %1563 = vmatprep.subr.mxu0 0.0
    %1564 = vmatpush1.msra.mxu0 0.0
    %1565 = vmatprep.subr.mxu0 0.0
    %1566 = vmatpush1.msra.mxu0 0.0
    %1567 = vmatprep.subr.mxu0 0.0
    %1568 = vmatpush1.msra.mxu0 0.0
    %1569 = vmatprep.subr.mxu0 0.0
    %1570 = vmatpush1.msra.mxu0 0.0
    %1571 = vmatprep.subr.mxu0 0.0
    %1572 = vmatpush1.msra.mxu0 0.0
    %1573 = vmatprep.subr.mxu0 0.0
    %1574 = vmatpush1.msra.mxu0 0.0
    %1575 = vmatprep.subr.mxu0 0.0
    %1576 = vmatpush1.msra.mxu0 0.0
    %1577 = vmatprep.subr.mxu0 0.0
    %1578 = vmatpush1.msra.mxu0 0.0
    %1579 = vmatprep.subr.mxu0 0.0
    %1580 = vmatpush1.msra.mxu0 0.0
    %1581 = vmatprep.subr.mxu0 0.0
    %1582 = vmatpush1.msra.mxu0 0.0
    %1583 = vmatprep.subr.mxu0 0.0
    %1584 = vmatpush1.msra.mxu0 0.0
    %1585 = vmatprep.subr.mxu0 0.0
    %1586 = vmatpush1.msra.mxu0 0.0
    %1587 = vmatprep.subr.mxu0 0.0
    %1588 = vmatpush1.msra.mxu0 0.0
    %1589 = vmatprep.subr.mxu0 0.0
    %1590 = vmatpush1.msra.mxu0 0.0
    %1591 = vmatprep.subr.mxu0 0.0
    %1592 = vmatpush1.msra.mxu0 0.0
    %1593 = vmatprep.mubr.f32.mxu0 0.0
    %1594 = vmatmul.mubr.f32.gmra.mrb[0].mxu0 %v1482
    %v1595 = vpop.f32.mrb[0].mxu0
    %v1596 = vadd.f32 %v1479, %v1595
    %v1597 = vpop.f32.mrb[0].mxu0
    %1598 = vmatprep.mubr.f32.mxu0 0.0
    %1599 = vmatmul.mubr.f32.gmra.mrb[0].mxu0 %v1485
    %v1600 = vpop.f32.mrb[0].mxu0
    %v1601 = vadd.f32 %v1479, %v1600
    %v1602 = vpop.f32.mrb[0].mxu0
    %1603 = vmatprep.mubr.f32.mxu0 0.0
    %1604 = vmatmul.mubr.f32.gmra.mrb[0].mxu0 %v1488
    %v1605 = vpop.f32.mrb[0].mxu0
    %v1606 = vadd.f32 %v1479, %v1605
    %v1607 = vpop.f32.mrb[0].mxu0
    %1608 = vmatprep.mubr.f32.mxu0 0.0
    %1609 = vmatmul.mubr.f32.gmra.mrb[0].mxu0 %v1491
    %v1610 = vpop.f32.mrb[0].mxu0
    %v1611 = vadd.f32 %v1479, %v1610
    %v1612 = vpop.f32.mrb[0].mxu0
    %1613 = vmatprep.mubr.f32.mxu0 0.0
    %1614 = vmatmul.mubr.f32.gmra.mrb[0].mxu0 %v1494
    %v1615 = vpop.f32.mrb[0].mxu0
    %v1616 = vadd.f32 %v1479, %v1615
    %v1617 = vpop.f32.mrb[0].mxu0
    %1618 = vmatprep.mubr.f32.mxu0 0.0
    %1619 = vmatmul.mubr.f32.gmra.mrb[0].mxu0 %v1497
    %v1620 = vpop.f32.mrb[0].mxu0
    %v1621 = vadd.f32 %v1479, %v1620
    %v1622 = vpop.f32.mrb[0].mxu0
    %1623 = vmatprep.mubr.f32.mxu0 0.0
    %1624 = vmatmul.mubr.f32.gmra.mrb[0].mxu0 %v1500
    %v1625 = vpop.f32.mrb[0].mxu0
    %v1626 = vadd.f32 %v1479, %v1625
    %v1627 = vpop.f32.mrb[0].mxu0
    %1628 = vmatprep.mubr.f32.mxu0 0.0
    %1629 = vmatmul.mubr.f32.gmra.mrb[0].mxu0 %v1503
    %v1630 = vpop.f32.mrb[0].mxu0
    %v1631 = vadd.f32 %v1479, %v1630
    %v1632 = vpop.f32.mrb[0].mxu0
    %1633 = vmatprep.mubr.f32.mxu0 0.0
    %1634 = vmatmul.mubr.f32.gmra.mrb[0].mxu0 %v1506
    %v1635 = vpop.f32.mrb[0].mxu0
    %v1636 = vadd.f32 %v1479, %v1635
    %v1637 = vpop.f32.mrb[0].mxu0
    %1638 = vmatprep.mubr.f32.mxu0 0.0
    %1639 = vmatmul.mubr.f32.gmra.mrb[0].mxu0 %v1509
    %v1640 = vpop.f32.mrb[0].mxu0
    %v1641 = vadd.f32 %v1479, %v1640
    %v1642 = vpop.f32.mrb[0].mxu0
    %1643 = vmatprep.mubr.f32.mxu0 0.0
    %1644 = vmatmul.mubr.f32.gmra.mrb[0].mxu0 %v1512
    %v1645 = vpop.f32.mrb[0].mxu0
    %v1646 = vadd.f32 %v1479, %v1645
    %v1647 = vpop.f32.mrb[0].mxu0
    %1648 = vmatprep.mubr.f32.mxu0 0.0
    %1649 = vmatmul.mubr.f32.gmra.mrb[0].mxu0 %v1515
    %v1650 = vpop.f32.mrb[0].mxu0
    %v1651 = vadd.f32 %v1479, %v1650
    %v1652 = vpop.f32.mrb[0].mxu0
    %1653 = vmatprep.mubr.f32.mxu0 0.0
    %1654 = vmatmul.mubr.f32.gmra.mrb[0].mxu0 %v1518
    %v1655 = vpop.f32.mrb[0].mxu0
    %v1656 = vadd.f32 %v1479, %v1655
    %v1657 = vpop.f32.mrb[0].mxu0
    %1658 = vmatprep.mubr.f32.mxu0 0.0
    %1659 = vmatmul.mubr.f32.gmra.mrb[0].mxu0 %v1521
    %v1660 = vpop.f32.mrb[0].mxu0
    %v1661 = vadd.f32 %v1479, %v1660
    %v1662 = vpop.f32.mrb[0].mxu0
    %1663 = vmatprep.mubr.f32.mxu0 0.0
    %1664 = vmatmul.mubr.f32.gmra.mrb[0].mxu0 %v1524
    %v1665 = vpop.f32.mrb[0].mxu0
    %v1666 = vadd.f32 %v1479, %v1665
    %v1667 = vpop.f32.mrb[0].mxu0
    %1668 = vmatprep.mubr.f32.mxu0 0.0
    %1669 = vmatmul.mubr.f32.gmra.mrb[0].mxu0 %v1527
    %v1670 = vpop.f32.mrb[0].mxu0
    %v1671 = vadd.f32 %v1479, %v1670
    %v1672 = vpop.f32.mrb[0].mxu0
    %1673 = vdwg.mxu0
    %v1674 = vmax.f32 %v1596, 0.0
    %v1675 = vmax.f32 %v1601, 0.0
    %v1676 = vmax.f32 %v1606, 0.0
    %v1677 = vmax.f32 %v1611, 0.0
    %v1678 = vmax.f32 %v1616, 0.0
    %v1679 = vmax.f32 %v1621, 0.0
    %v1680 = vmax.f32 %v1626, 0.0
    %v1681 = vmax.f32 %v1631, 0.0
    %v1682 = vmax.f32 %v1636, 0.0
    %v1683 = vmax.f32 %v1641, 0.0
    %v1684 = vmax.f32 %v1646, 0.0
    %v1685 = vmax.f32 %v1651, 0.0
    %v1686 = vmax.f32 %v1656, 0.0
    %v1687 = vmax.f32 %v1661, 0.0
    %v1688 = vmax.f32 %v1666, 0.0
    %v1689 = vmax.f32 %v1671, 0.0
    %v1690 = vadd.f32 %v1452, %v1674
    %v1691 = vadd.f32 %v1453, %v1675
    %v1692 = vadd.f32 %v1454, %v1676
    %v1693 = vadd.f32 %v1455, %v1677
    %v1694 = vadd.f32 %v1456, %v1678
    %v1695 = vadd.f32 %v1457, %v1679
    %v1696 = vadd.f32 %v1458, %v1680
    %v1697 = vadd.f32 %v1459, %v1681
    %v1698 = vadd.f32 %v1460, %v1682
    %v1699 = vadd.f32 %v1461, %v1683
    %v1700 = vadd.f32 %v1462, %v1684
    %v1701 = vadd.f32 %v1463, %v1685
    %v1702 = vadd.f32 %v1464, %v1686
    %v1703 = vadd.f32 %v1465, %v1687
    %v1704 = vadd.f32 %v1466, %v1688
    %v1705 = vadd.f32 %v1467, %v1689
    %v1706 = vld [vmem:[%s5] sm:$0x1]
    %v1708 = vlaneseq
    %v1709 = vshrl.u32 %v1708, 7
    %v1710 = vsub.s32 0, %v1709
    %v1711 = vrot.slane %v1706, %v1710
    %v1713 = vmul.f32 %v1690, %v1711
    %v1714 = vmul.f32 %v1691, %v1711
    %v1715 = vmul.f32 %v1692, %v1711
    %v1716 = vmul.f32 %v1693, %v1711
    %v1717 = vmul.f32 %v1694, %v1711
    %v1718 = vmul.f32 %v1695, %v1711
    %v1719 = vmul.f32 %v1696, %v1711
    %v1720 = vmul.f32 %v1697, %v1711
    %v1721 = vmul.f32 %v1698, %v1711
    %v1722 = vmul.f32 %v1699, %v1711
    %v1723 = vmul.f32 %v1700, %v1711
    %v1724 = vmul.f32 %v1701, %v1711
    %v1725 = vmul.f32 %v1702, %v1711
    %v1726 = vmul.f32 %v1703, %v1711
    %v1727 = vmul.f32 %v1704, %v1711
    %v1728 = vmul.f32 %v1705, %v1711
    %v1729 = vsel %vm70, %v1713, 0.0
    %1730 = vadd.xlane.f32.xlu0 %v1729
    %v1731 = vpop.xlane.xlu0 %1730
    %v1732 = vsel %vm70, %v1714, 0.0
    %1733 = vadd.xlane.f32.xlu0 %v1732
    %v1734 = vpop.xlane.xlu0 %1733
    %v1735 = vsel %vm70, %v1715, 0.0
    %1736 = vadd.xlane.f32.xlu0 %v1735
    %v1737 = vpop.xlane.xlu0 %1736
    %v1738 = vsel %vm70, %v1716, 0.0
    %1739 = vadd.xlane.f32.xlu0 %v1738
    %v1740 = vpop.xlane.xlu0 %1739
    %v1741 = vsel %vm70, %v1717, 0.0
    %1742 = vadd.xlane.f32.xlu0 %v1741
    %v1743 = vpop.xlane.xlu0 %1742
    %v1744 = vsel %vm70, %v1718, 0.0
    %1745 = vadd.xlane.f32.xlu0 %v1744
    %v1746 = vpop.xlane.xlu0 %1745
    %v1747 = vsel %vm70, %v1719, 0.0
    %1748 = vadd.xlane.f32.xlu0 %v1747
    %v1749 = vpop.xlane.xlu0 %1748
    %v1750 = vsel %vm70, %v1720, 0.0
    %1751 = vadd.xlane.f32.xlu0 %v1750
    %v1752 = vpop.xlane.xlu0 %1751
    %v1753 = vsel %vm70, %v1721, 0.0
    %1754 = vadd.xlane.f32.xlu0 %v1753
    %v1755 = vpop.xlane.xlu0 %1754
    %v1756 = vsel %vm70, %v1722, 0.0
    %1757 = vadd.xlane.f32.xlu0 %v1756
    %v1758 = vpop.xlane.xlu0 %1757
    %v1759 = vsel %vm70, %v1723, 0.0
    %1760 = vadd.xlane.f32.xlu0 %v1759
    %v1761 = vpop.xlane.xlu0 %1760
    %v1762 = vsel %vm70, %v1724, 0.0
    %1763 = vadd.xlane.f32.xlu0 %v1762
    %v1764 = vpop.xlane.xlu0 %1763
    %v1765 = vsel %vm70, %v1725, 0.0
    %1766 = vadd.xlane.f32.xlu0 %v1765
    %v1767 = vpop.xlane.xlu0 %1766
    %v1768 = vsel %vm70, %v1726, 0.0
    %1769 = vadd.xlane.f32.xlu0 %v1768
    %v1770 = vpop.xlane.xlu0 %1769
    %v1771 = vsel %vm70, %v1727, 0.0
    %1772 = vadd.xlane.f32.xlu0 %v1771
    %v1773 = vpop.xlane.xlu0 %1772
    %v1774 = vsel %vm70, %v1728, 0.0
    %1775 = vadd.xlane.f32.xlu0 %v1774
    %v1776 = vpop.xlane.xlu0 %1775
    %v1777 = vld [vmem:[#allocation2] sm:$0x1]
    %1779 = vset.pattern.permute.xlu0 0
    %1780 = vperm.xlu0 %1779, %v1777
    %v1781 = vpop.permute.xlu0 %1780
    %v1783 = vlaneseq
    %v1784 = vshrl.u32 %v1783, 7
    %v1785 = vsub.s32 0, %v1784
    %v1786 = vrot.slane %v1781, %v1785
    %v1787 = vadd.f32 %v1731, %v1786
    %v1788 = vadd.f32 %v1734, %v1786
    %v1789 = vadd.f32 %v1737, %v1786
    %v1790 = vadd.f32 %v1740, %v1786
    %v1791 = vadd.f32 %v1743, %v1786
    %v1792 = vadd.f32 %v1746, %v1786
    %v1793 = vadd.f32 %v1749, %v1786
    %v1794 = vadd.f32 %v1752, %v1786
    %v1795 = vadd.f32 %v1755, %v1786
    %v1796 = vadd.f32 %v1758, %v1786
    %v1797 = vadd.f32 %v1761, %v1786
    %v1798 = vadd.f32 %v1764, %v1786
    %v1799 = vadd.f32 %v1767, %v1786
    %v1800 = vadd.f32 %v1770, %v1786
    %v1801 = vadd.f32 %v1773, %v1786
    %v1802 = vadd.f32 %v1776, %v1786
    %v1819 = vlaneseq
    %v1820 = vand.u32 %v1819, 127
    %v1821 = vlaneseq
    %v1822 = vshrl.u32 %v1821, 7
    %v1823 = vsub.s32 %v1820, %v1822
    %v1824 = vrot.slane %v1787, %v1823
    %v1825 = vadd.s32 %v1820, 4294967288
    %v1826 = vlaneseq
    %v1827 = vshrl.u32 %v1826, 7
    %v1828 = vsub.s32 %v1825, %v1827
    %v1829 = vrot.slane %v1788, %v1828
    %vm1830 = vcmask 130112
    %v1831 = vsel %vm1830, %v1829, %v1824
    %v1832 = vadd.s32 %v1820, 4294967280
    %v1833 = vlaneseq
    %v1834 = vshrl.u32 %v1833, 7
    %v1835 = vsub.s32 %v1832, %v1834
    %v1836 = vrot.slane %v1789, %v1835
    %vm1837 = vcmask 195712
    %v1838 = vsel %vm1837, %v1836, %v1831
    %v1839 = vadd.s32 %v1820, 4294967272
    %v1840 = vlaneseq
    %v1841 = vshrl.u32 %v1840, 7
    %v1842 = vsub.s32 %v1839, %v1841
    %v1843 = vrot.slane %v1790, %v1842
    %vm1844 = vcmask 261312
    %v1845 = vsel %vm1844, %v1843, %v1838
    %v1846 = vadd.s32 %v1820, 4294967264
    %v1847 = vlaneseq
    %v1848 = vshrl.u32 %v1847, 7
    %v1849 = vsub.s32 %v1846, %v1848
    %v1850 = vrot.slane %v1791, %v1849
    %vm1851 = vcmask 326912
    %v1852 = vsel %vm1851, %v1850, %v1845
    %v1853 = vadd.s32 %v1820, 4294967256
    %v1854 = vlaneseq
    %v1855 = vshrl.u32 %v1854, 7
    %v1856 = vsub.s32 %v1853, %v1855
    %v1857 = vrot.slane %v1792, %v1856
    %vm1858 = vcmask 392512
    %v1859 = vsel %vm1858, %v1857, %v1852
    %v1860 = vadd.s32 %v1820, 4294967248
    %v1861 = vlaneseq
    %v1862 = vshrl.u32 %v1861, 7
    %v1863 = vsub.s32 %v1860, %v1862
    %v1864 = vrot.slane %v1793, %v1863
    %vm1865 = vcmask 458112
    %v1866 = vsel %vm1865, %v1864, %v1859
    %v1867 = vadd.s32 %v1820, 4294967240
    %v1868 = vlaneseq
    %v1869 = vshrl.u32 %v1868, 7
    %v1870 = vsub.s32 %v1867, %v1869
    %v1871 = vrot.slane %v1794, %v1870
    %vm1872 = vcmask 523712
    %v1873 = vsel %vm1872, %v1871, %v1866
    %v1874 = vadd.s32 %v1820, 4294967232
    %v1875 = vlaneseq
    %v1876 = vshrl.u32 %v1875, 7
    %v1877 = vsub.s32 %v1874, %v1876
    %v1878 = vrot.slane %v1795, %v1877
    %vm1879 = vcmask 589312
    %v1880 = vsel %vm1879, %v1878, %v1873
    %v1881 = vadd.s32 %v1820, 4294967224
    %v1882 = vlaneseq
    %v1883 = vshrl.u32 %v1882, 7
    %v1884 = vsub.s32 %v1881, %v1883
    %v1885 = vrot.slane %v1796, %v1884
    %vm1886 = vcmask 654912
    %v1887 = vsel %vm1886, %v1885, %v1880
    %v1888 = vadd.s32 %v1820, 4294967216
    %v1889 = vlaneseq
    %v1890 = vshrl.u32 %v1889, 7
    %v1891 = vsub.s32 %v1888, %v1890
    %v1892 = vrot.slane %v1797, %v1891
    %vm1893 = vcmask 720512
    %v1894 = vsel %vm1893, %v1892, %v1887
    %v1895 = vadd.s32 %v1820, 4294967208
    %v1896 = vlaneseq
    %v1897 = vshrl.u32 %v1896, 7
    %v1898 = vsub.s32 %v1895, %v1897
    %v1899 = vrot.slane %v1798, %v1898
    %vm1900 = vcmask 786112
    %v1901 = vsel %vm1900, %v1899, %v1894
    %v1902 = vadd.s32 %v1820, 4294967200
    %v1903 = vlaneseq
    %v1904 = vshrl.u32 %v1903, 7
    %v1905 = vsub.s32 %v1902, %v1904
    %v1906 = vrot.slane %v1799, %v1905
    %vm1907 = vcmask 851712
    %v1908 = vsel %vm1907, %v1906, %v1901
    %v1909 = vadd.s32 %v1820, 4294967192
    %v1910 = vlaneseq
    %v1911 = vshrl.u32 %v1910, 7
    %v1912 = vsub.s32 %v1909, %v1911
    %v1913 = vrot.slane %v1800, %v1912
    %vm1914 = vcmask 917312
    %v1915 = vsel %vm1914, %v1913, %v1908
    %v1916 = vadd.s32 %v1820, 4294967184
    %v1917 = vlaneseq
    %v1918 = vshrl.u32 %v1917, 7
    %v1919 = vsub.s32 %v1916, %v1918
    %v1920 = vrot.slane %v1801, %v1919
    %vm1921 = vcmask 982912
    %v1922 = vsel %vm1921, %v1920, %v1915
    %v1923 = vadd.s32 %v1820, 4294967176
    %v1924 = vlaneseq
    %v1925 = vshrl.u32 %v1924, 7
    %v1926 = vsub.s32 %v1923, %v1925
    %v1927 = vrot.slane %v1802, %v1926
    %vm1928 = vcmask 1048512
    %v1929 = vsel %vm1928, %v1927, %v1922
    %1931 = vst [vmem:[#allocation6] sm:$0x1] %v1929
    // Predicated region
    $region34: #{tpu_custom_call.1} parent=1 // pred_check
      _
    $region35: #{tpu_custom_call.1} parent=1 // pred_check_branch
      %1933 = sbr.rel (0) target = $region37
    $region36: #{tpu_custom_call.1} parent=1 // pred_region
      %s1935 = ssub.s32 16, 16
      %1936 = vsyncadd [#allocation5], %s1935
      %s1938 = sshll.u32 [#allocation6], 4
      %s1939 = int_to_ptr.vmem [resolvable:$true] %s1938
      %1941 = dma.vmem_to_hbm [thread:$0]  %s1939, 16, %s7, [#allocation5]
    $region37: #{tpu_custom_call.1} parent=1 // pred_fallthru
      _
    // Predicated region
    $region38: #{tpu_custom_call.1} parent=1 // pred_check
      _
    $region39: #{tpu_custom_call.1} parent=1 // pred_check_branch
      %1943 = sbr.rel (0) target = $region41
    $region40: #{tpu_custom_call.1} parent=1 // pred_region
      %1944 = dma.done [#allocation5], 16
    $region41: #{tpu_custom_call.1} parent=1 // pred_fallthru
      _
    %1945 = vsyncpa [#allocation4], 1
    %1946 = vsyncpa [#allocation5], 1

</llo_original>
